<compile_context>
chip_gen: v7x
topology: tpu7x:2x2x1
jax: 0.10.0
libtpu: 0.0.40
codegen_flags: <defaults>
</compile_context>

<pallas_src>
import math
import functools

import jax
import jax.numpy as jnp
from jax.experimental import pallas as pl
from jax.experimental.pallas import tpu as pltpu


# -----------------------------------------------------------------------------
# Parameter construction (shapes exactly as in Operator2.__init__).
# -----------------------------------------------------------------------------
def make_operator2_params(key, Din, Dout, chi):
    npout = int(math.prod(Dout))
    tensors = []
    for i in range(len(Din) - 1):
        d0 = Din[i] if i == 0 else Din[i + 1]
        d1 = Din[1] if i == 0 else chi
        if i == 1:
            d2 = Dout[2]
        elif i == 4:
            d2 = Dout[5]
        else:
            d2 = chi
        d3 = chi if i == 2 else Dout[i]
        key, sub = jax.random.split(key)
        tensors.append(jax.random.normal(sub, (d0, d1, d2, d3), jnp.float32)
                       / math.sqrt(npout))
    return tensors                     # [tensors_1, ..., tensors_5]


# -----------------------------------------------------------------------------
# One-time weight repack (outside the hot path, plain JAX).
#
# Operator2.forward, traced through its reshape/view bookkeeping, applies
# 16x16 matrices (site tensor reshaped (i*j, l*m)) to adjacent base-d digit
# pairs of the per-sample feature index:
#     tensors_1 -> digits (1,2), tensors_4 -> (2,3),
#     tensors_3 -> (3,4),        tensors_5 -> (3,4),   tensors_2 -> (5,6).
# Digits 1-4 and 5-6 are disjoint, so the chain factorizes exactly into a
# (d^4 x d^4) operator on the leading digits and a (d^2 x d^2) operator on the
# trailing digits.
# -----------------------------------------------------------------------------
def precompute_operator2_weights(tensors, Din, Dout, chi):
    d = Din[0]
    assert len(Din) == 6 and len(Dout) == 6
    assert all(v == d for v in Din) and all(v == d for v in Dout) and chi == d
    f32 = jnp.float32
    t1, t2, t3, t4, t5 = [t.astype(f32) for t in tensors]

    # Push the identity on the leading-4-digit space through the four site
    # contractions, in the order the module applies them.
    E = jnp.eye(d ** 4, dtype=f32).reshape(d ** 4, d, d, d, d)
    E = jnp.einsum('zabcd,abAB->zABcd', E, t1)      # site on digits (1,2)
    E = jnp.einsum('zabcd,bcBC->zaBCd', E, t4)      # site on digits (2,3)
    E = jnp.einsum('zabcd,cdCD->zabCD', E, t3)      # site on digits (3,4)
    E = jnp.einsum('zabcd,cdCD->zabCD', E, t5)      # site on digits (3,4)
    w_left = E.reshape(d ** 4, d ** 4)              # acts as  row_vec @ w_left

    # tensors_2 acts on the trailing digit pair: out[n] = sum_c in[c] * W[c, n]
    w_right = t2.reshape(Din[2] * chi, Dout[2] * Dout[1])       # (16, 16)

    # Pre-transpose w_left so the kernel's second matmul needs no transpose.
    return w_right, jnp.transpose(w_left)


# -----------------------------------------------------------------------------
# Fused Pallas kernel: whole Operator2 forward for one batch tile.
# -----------------------------------------------------------------------------
def _operator2_kernel(x_ref, wr_ref, wlt_ref, o_ref, *, batch_tile, pdim, qdim):
    # x_ref  : (batch_tile * pdim, qdim)   streamed activation tile
    # wr_ref : (qdim, qdim)                VMEM-resident right operator
    # wlt_ref: (pdim, pdim)                VMEM-resident (transposed) left op
    # o_ref  : (batch_tile * pdim, qdim)
    wr = wr_ref[...]
    wlt = wlt_ref[...]

    # Contract the trailing digit pair for the whole tile in one MXU call.
    y = jnp.dot(x_ref[...], wr, preferred_element_type=jnp.float32)

    # Contract the leading four digits: one (pdim x pdim) @ (pdim x qdim)
    # matmul per batch element (small static unroll; K = 256 keeps the MXU
    # reasonably fed).  Everything stays in VMEM / vregs.
    for b in range(batch_tile):
        yb = y[b * pdim:(b + 1) * pdim, :]
        ob = jnp.dot(wlt, yb, preferred_element_type=jnp.float32)
        o_ref[b * pdim:(b + 1) * pdim, :] = ob.astype(o_ref.dtype)


def operator2_forward(x, w_right, w_left_t, *, batch_tile=None):
    B, F = x.shape
    qdim = w_right.shape[0]
    pdim = w_left_t.shape[0]
    assert F == pdim * qdim, (x.shape, pdim, qdim)
    if batch_tile is None:
        batch_tile = min(B, 8)
    assert B % batch_tile == 0, (B, batch_tile)
    num_tiles = B // batch_tile
    rows = batch_tile * pdim

    # Free row-major reshape (no data movement): feature index -> (p, q).
    x2 = x.reshape(B * pdim, qdim)

    kernel = functools.partial(_operator2_kernel, batch_tile=batch_tile,
                               pdim=pdim, qdim=qdim)
    out2 = pl.pallas_call(
        kernel,
        out_shape=jax.ShapeDtypeStruct((B * pdim, qdim), jnp.float32),
        grid=(num_tiles,),
        in_specs=[
            pl.BlockSpec((rows, qdim), lambda i: (i, 0)),   # streamed x tile
            pl.BlockSpec((qdim, qdim), lambda i: (0, 0)),   # resident weight
            pl.BlockSpec((pdim, pdim), lambda i: (0, 0)),   # resident weight
        ],
        out_specs=pl.BlockSpec((rows, qdim), lambda i: (i, 0)),
        compiler_params=pltpu.CompilerParams(
            dimension_semantics=("parallel",)),
    )(x2, w_right, w_left_t)
    return out2.reshape(B, F)


# -----------------------------------------------------------------------------
# Pure-JAX literal transcription of Operator2.forward (correctness reference).
# -----------------------------------------------------------------------------
def operator2_forward_ref(x, tensors, Din, Dout, chi):
    B = x.shape[0]
    order = [1, 4, 3, 5, 2]
    inp = x.reshape(B, 1, Din[0], Din[1], -1)
    for i, j in enumerate(order):
        inp = jnp.einsum('bxijk,ijlm->bxlmk', inp, tensors[j - 1])
        if i == 4:
            break
        if i == 2:
            newshape = (inp.shape[0], inp.shape[1], Din[order[3]], chi, -1)
        elif i == 3:
            newshape = (inp.shape[0],
                        inp.shape[1] * inp.shape[2] * inp.shape[3],
                        Din[order[4]], chi, -1)
        else:
            newshape = (inp.shape[0], inp.shape[1] * inp.shape[3],
                        Din[order[i + 1]], chi, -1)
        inp = inp.reshape(newshape)
    return inp.reshape(B, -1)


if __name__ == "__main__":
    # Small shapes consistent with the module: 6 input/output factors of 4,
    # bond dimension 4  ->  features = 4**6 = 4096.
    Din = (4, 4, 4, 4, 4, 4)
    Dout = (4, 4, 4, 4, 4, 4)
    chi = 4
    B = 8
    batch_tile = 4            # -> grid of 2 'parallel' batch tiles

    key = jax.random.PRNGKey(0)
    key, kx = jax.random.split(key)
    npin = int(math.prod(Din))
    x = jax.random.normal(kx, (B, npin), jnp.float32)

    tensors = make_operator2_params(key, Din, Dout, chi)
    w_right, w_left_t = precompute_operator2_weights(tensors, Din, Dout, chi)
    w_right = jax.block_until_ready(w_right)
    w_left_t = jax.block_until_ready(w_left_t)

    fwd = jax.jit(functools.partial(operator2_forward, batch_tile=batch_tile))
    out = jax.block_until_ready(fwd(x, w_right, w_left_t))

    ref = jax.block_until_ready(operator2_forward_ref(x, tensors, Din, Dout, chi))

    assert out.shape == (B, int(math.prod(Dout))), out.shape
    scale = float(jnp.max(jnp.abs(ref)))
    err = float(jnp.max(jnp.abs(out - ref)))
    assert scale > 0.0
    assert err <= 1e-4 * scale, f"max abs err {err} vs ref scale {scale}"

    print("KERNEL_OK")
</pallas_src>

<mosaic_0001>
module attributes {stable_mosaic.version = 11 : i64} {
  func.func @_operator2_kernel(%arg0: i32, %arg1: memref<1024x16xf32, #tpu.memory_space<vmem>>, %arg2: memref<16x16xf32, #tpu.memory_space<vmem>>, %arg3: memref<256x256xf32, #tpu.memory_space<vmem>>, %arg4: memref<1024x16xf32, #tpu.memory_space<vmem>>) attributes {dimension_semantics = [#tpu.dimension_semantics<parallel>], iteration_bounds = array<i64: 2>, scalar_prefetch = 0 : i64, scratch_operands = 0 : i64, tpu.core_type = #tpu.core_type<tc>, window_params = [{transform_indices = @transform_0, window_bounds = array<i64: 1024, 16>}, {pipeline_mode = #tpu.pipeline_mode<synchronous>, transform_indices = @transform_1, window_bounds = array<i64: 16, 16>}, {pipeline_mode = #tpu.pipeline_mode<synchronous>, transform_indices = @transform_2, window_bounds = array<i64: 256, 256>}, {transform_indices = @transform_3, window_bounds = array<i64: 1024, 16>}]} {
    %c0 = arith.constant 0 : index
    %c0_0 = arith.constant 0 : index
    %0 = vector.load %arg2[%c0, %c0_0] : memref<16x16xf32, #tpu.memory_space<vmem>>, vector<16x16xf32>
    %c0_1 = arith.constant 0 : index
    %c0_2 = arith.constant 0 : index
    %1 = vector.load %arg3[%c0_1, %c0_2] : memref<256x256xf32, #tpu.memory_space<vmem>>, vector<256x256xf32>
    %c0_3 = arith.constant 0 : index
    %c0_4 = arith.constant 0 : index
    %2 = vector.load %arg1[%c0_3, %c0_4] : memref<1024x16xf32, #tpu.memory_space<vmem>>, vector<1024x16xf32>
    %cst = arith.constant dense<0.000000e+00> : vector<1024x16xf32>
    %3 = tpu.matmul %2, %0, %cst {dimension_numbers = #tpu.dot_dimension_numbers<[1], [0], [0], [1], [0, 0, 1, 1], [], []>} : vector<1024x16xf32>, vector<16x16xf32>, vector<1024x16xf32> -> vector<1024x16xf32>
    %4 = vector.extract_strided_slice %3 {offsets = [0, 0], sizes = [256, 16], strides = [1, 1]} : vector<1024x16xf32> to vector<256x16xf32>
    %cst_5 = arith.constant dense<0.000000e+00> : vector<256x16xf32>
    %5 = tpu.matmul %1, %4, %cst_5 {dimension_numbers = #tpu.dot_dimension_numbers<[1], [0], [0], [1], [0, 0, 1, 1], [], []>} : vector<256x256xf32>, vector<256x16xf32>, vector<256x16xf32> -> vector<256x16xf32>
    %c0_6 = arith.constant 0 : index
    %c0_7 = arith.constant 0 : index
    %6 = vector.load %arg4[%c0_6, %c0_7] : memref<1024x16xf32, #tpu.memory_space<vmem>>, vector<256x16xf32>
    tpu.vector_store %arg4[%c0_6, %c0_7], %5 {strides = array<i32>} : memref<1024x16xf32, #tpu.memory_space<vmem>>, vector<256x16xf32>,
    %7 = vector.extract_strided_slice %3 {offsets = [256, 0], sizes = [256, 16], strides = [1, 1]} : vector<1024x16xf32> to vector<256x16xf32>
    %cst_8 = arith.constant dense<0.000000e+00> : vector<256x16xf32>
    %8 = tpu.matmul %1, %7, %cst_8 {dimension_numbers = #tpu.dot_dimension_numbers<[1], [0], [0], [1], [0, 0, 1, 1], [], []>} : vector<256x256xf32>, vector<256x16xf32>, vector<256x16xf32> -> vector<256x16xf32>
    %c256 = arith.constant 256 : index
    %c0_9 = arith.constant 0 : index
    %9 = vector.load %arg4[%c256, %c0_9] : memref<1024x16xf32, #tpu.memory_space<vmem>>, vector<256x16xf32>
    tpu.vector_store %arg4[%c256, %c0_9], %8 {strides = array<i32>} : memref<1024x16xf32, #tpu.memory_space<vmem>>, vector<256x16xf32>,
    %10 = vector.extract_strided_slice %3 {offsets = [512, 0], sizes = [256, 16], strides = [1, 1]} : vector<1024x16xf32> to vector<256x16xf32>
    %cst_10 = arith.constant dense<0.000000e+00> : vector<256x16xf32>
    %11 = tpu.matmul %1, %10, %cst_10 {dimension_numbers = #tpu.dot_dimension_numbers<[1], [0], [0], [1], [0, 0, 1, 1], [], []>} : vector<256x256xf32>, vector<256x16xf32>, vector<256x16xf32> -> vector<256x16xf32>
    %c512 = arith.constant 512 : index
    %c0_11 = arith.constant 0 : index
    %12 = vector.load %arg4[%c512, %c0_11] : memref<1024x16xf32, #tpu.memory_space<vmem>>, vector<256x16xf32>
    tpu.vector_store %arg4[%c512, %c0_11], %11 {strides = array<i32>} : memref<1024x16xf32, #tpu.memory_space<vmem>>, vector<256x16xf32>,
    %13 = vector.extract_strided_slice %3 {offsets = [768, 0], sizes = [256, 16], strides = [1, 1]} : vector<1024x16xf32> to vector<256x16xf32>
    %cst_12 = arith.constant dense<0.000000e+00> : vector<256x16xf32>
    %14 = tpu.matmul %1, %13, %cst_12 {dimension_numbers = #tpu.dot_dimension_numbers<[1], [0], [0], [1], [0, 0, 1, 1], [], []>} : vector<256x256xf32>, vector<256x16xf32>, vector<256x16xf32> -> vector<256x16xf32>
    %c768 = arith.constant 768 : index
    %c0_13 = arith.constant 0 : index
    %15 = vector.load %arg4[%c768, %c0_13] : memref<1024x16xf32, #tpu.memory_space<vmem>>, vector<256x16xf32>
    tpu.vector_store %arg4[%c768, %c0_13], %14 {strides = array<i32>} : memref<1024x16xf32, #tpu.memory_space<vmem>>, vector<256x16xf32>,
    return
  }
  func.func @transform_0(%arg0: i32) -> (i32, i32) {
    %c0_i32 = arith.constant 0 : i32
    %c0_i32_0 = arith.constant 0 : i32
    return %arg0, %c0_i32 : i32, i32
  }
  func.func @transform_1(%arg0: i32) -> (i32, i32) {
    %c0_i32 = arith.constant 0 : i32
    %c0_i32_0 = arith.constant 0 : i32
    %c0_i32_1 = arith.constant 0 : i32
    return %c0_i32, %c0_i32_0 : i32, i32
  }
  func.func @transform_2(%arg0: i32) -> (i32, i32) {
    %c0_i32 = arith.constant 0 : i32
    %c0_i32_0 = arith.constant 0 : i32
    %c0_i32_1 = arith.constant 0 : i32
    return %c0_i32, %c0_i32_0 : i32, i32
  }
  func.func @transform_3(%arg0: i32) -> (i32, i32) {
    %c0_i32 = arith.constant 0 : i32
    %c0_i32_0 = arith.constant 0 : i32
    return %arg0, %c0_i32 : i32, i32
  }
}

</mosaic_0001>

<llo_original>
// kernel: operator2_forward.1
$region0: #{operator2_forward.1}
  #allocation0 [shape = 'u32[]', space=smem, size = 0x4, offset = 0x4, fixed_abs, tag = 'smem constant byte address 0x4 - core index']
  #allocation1 [shape = 'u32[144,128]{1,0:T(1,128)}', space=vmem, size = 0x12000, scoped, tag = 'internal scratch']
  %s0 = inlined_call_operand.vmem [shape: f32[2048,16], index: 0, kind: input, shape index: {}]
  %s1 = inlined_call_operand.vmem [shape: f32[16,16], index: 1, kind: input, shape index: {}]
  %s2 = inlined_call_operand.vmem [shape: f32[256,256], index: 2, kind: input, shape index: {}]
  %s3 = inlined_call_operand.vmem [shape: f32[2048,16], index: 3, kind: output, shape index: {}]
  %s4 = sld [smem:[#allocation0]]
  $region45: #{operator2_forward.1} parent=0
    _
  %s6 = ssub.s32 1, %s4
  %s7 = scalar_select 0, %s6, %s4
  loop: start=0, step=1, limit=4
  $region2: #{operator2_forward.1} parent=0 // loop_pre_header
    _
  $region3: #{operator2_forward.1} parent=0 // loop_header
    %s9 = sphi 0, %s13
    %p10 = scmp.ge.s32.totalorder %s9, 4
    %s19 = sphi 0, %s21
    %s22 = sphi 0, %s19
    %s23 = sphi 0, %s22
    %s39 = sphi 0, %s23
    %s43 = sphi 0, %s43
    %s45 = sphi 0, %s43
    %s46 = sphi 0, %s45
    %s60 = sphi 0, %s46
    %s64 = sphi 0, %s64
    %s66 = sphi 0, %s64
    %s67 = sphi 0, %s66
    %s81 = sphi 0, %s67
    %s87 = sphi 0, %s89
    %s90 = sphi 0, %s87
    %s91 = sphi 0, %s90
    %s107 = sphi 0, %s91
  $region4: #{operator2_forward.1} parent=0 // loop_header_branch
    %12 = sbr.rel (%p10) target = $region8
  $region5: #{operator2_forward.1} parent=0 // loop_body
    %s14 = ssub.s32 %s9, 1
    %s15 = ssub.s32 %s9, 2
    %s16 = sadd.s32 %s9, 1
    %s17 = ssub.s32 %s9, %s16
    %p18 = scmp.eq.s32.totalorder %s17, 0
    %s20 = sadd.s32 %s19, 1
    %s21 = scalar_select %p18, %s19, %s20
    %p24 = pneg %p18
    %p25 = scmp.eq.s32.totalorder %s9, 1
    %p26 = por %p24, %p25
    %p27 = scmp.ne.s32.totalorder %s19, %s22
    %p28 = scmp.eq.s32.totalorder %s9, 0
    %p29 = por %p27, %p28
    %p30 = scmp.ne.s32.totalorder %s19, %s22
    %p31 = scmp.eq.s32.totalorder %s14, 1
    %p32 = por %p30, %p31
    %p33 = scmp.ne.s32.totalorder %s22, %s23
    %p34 = scmp.eq.s32.totalorder %s14, 0
    %p35 = por %p33, %p34
    %p36 = scmp.ne.s32.totalorder %s22, %s23
    %p37 = scmp.eq.s32.totalorder %s15, 1
    %p38 = por %p36, %p37
    %p40 = scmp.ne.s32.totalorder %s23, %s39
    %p41 = scmp.eq.s32.totalorder %s15, 0
    %p42 = por %p40, %p41
    %s44 = sadd.s32 %s43, 1
    %p47 = scmp.eq.s32.totalorder %s9, 1
    %p48 = scmp.ne.s32.totalorder %s43, %s45
    %p49 = scmp.eq.s32.totalorder %s9, 0
    %p50 = por %p48, %p49
    %p51 = scmp.ne.s32.totalorder %s43, %s45
    %p52 = scmp.eq.s32.totalorder %s14, 1
    %p53 = por %p51, %p52
    %p54 = scmp.ne.s32.totalorder %s45, %s46
    %p55 = scmp.eq.s32.totalorder %s14, 0
    %p56 = por %p54, %p55
    %p57 = scmp.ne.s32.totalorder %s45, %s46
    %p58 = scmp.eq.s32.totalorder %s15, 1
    %p59 = por %p57, %p58
    %p61 = scmp.ne.s32.totalorder %s46, %s60
    %p62 = scmp.eq.s32.totalorder %s15, 0
    %p63 = por %p61, %p62
    %s65 = sadd.s32 %s64, 1
    %p68 = scmp.eq.s32.totalorder %s9, 1
    %p69 = scmp.ne.s32.totalorder %s64, %s66
    %p70 = scmp.eq.s32.totalorder %s9, 0
    %p71 = por %p69, %p70
    %p72 = scmp.ne.s32.totalorder %s64, %s66
    %p73 = scmp.eq.s32.totalorder %s14, 1
    %p74 = por %p72, %p73
    %p75 = scmp.ne.s32.totalorder %s66, %s67
    %p76 = scmp.eq.s32.totalorder %s14, 0
    %p77 = por %p75, %p76
    %p78 = scmp.ne.s32.totalorder %s66, %s67
    %p79 = scmp.eq.s32.totalorder %s15, 1
    %p80 = por %p78, %p79
    %p82 = scmp.ne.s32.totalorder %s67, %s81
    %p83 = scmp.eq.s32.totalorder %s15, 0
    %p84 = por %p82, %p83
    %s85 = ssub.s32 %s9, %s16
    %p86 = scmp.eq.s32.totalorder %s85, 0
    %s88 = sadd.s32 %s87, 1
    %s89 = scalar_select %p86, %s87, %s88
    %p92 = pneg %p86
    %p93 = scmp.eq.s32.totalorder %s9, 1
    %p94 = por %p92, %p93
    %p95 = scmp.ne.s32.totalorder %s87, %s90
    %p96 = scmp.eq.s32.totalorder %s9, 0
    %p97 = por %p95, %p96
    %p98 = scmp.ne.s32.totalorder %s87, %s90
    %p99 = scmp.eq.s32.totalorder %s14, 1
    %p100 = por %p98, %p99
    %p101 = scmp.ne.s32.totalorder %s90, %s91
    %p102 = scmp.eq.s32.totalorder %s14, 0
    %p103 = por %p101, %p102
    %p104 = scmp.ne.s32.totalorder %s90, %s91
    %p105 = scmp.eq.s32.totalorder %s15, 1
    %p106 = por %p104, %p105
    %p108 = scmp.ne.s32.totalorder %s91, %s107
    %p109 = scmp.eq.s32.totalorder %s15, 0
    %p110 = por %p108, %p109
    %p111 = scmp.le.s32.totalorder 1, %s9
    %p112 = scmp.lt.s32.totalorder %s9, 3
    %p113 = pnand %p111, %p112
    %p114 = pneg %p113
    // Predicated region
    $region9: #{operator2_forward.1} parent=5 // pred_check
      _
    $region10: #{operator2_forward.1} parent=5 // pred_check_branch
      %116 = sbr.rel (%p113) target = $region12
    $region11: #{operator2_forward.1} parent=5 // pred_region
      %s117 = ssub.s32 %s9, 1
      // Predicated region
      $region13: #{operator2_forward.1} parent=11 // pred_check
        %p118 = pneg %p56
      $region14: #{operator2_forward.1} parent=11 // pred_check_branch
        %120 = sbr.rel (%p118) target = $region16
      $region15: #{operator2_forward.1} parent=11 // pred_region
        _
      $region16: #{operator2_forward.1} parent=11 // pred_fallthru
        _
      // Predicated region
      $region17: #{operator2_forward.1} parent=11 // pred_check
        %p121 = pneg %p77
      $region18: #{operator2_forward.1} parent=11 // pred_check_branch
        %123 = sbr.rel (%p121) target = $region20
      $region19: #{operator2_forward.1} parent=11 // pred_region
        _
      $region20: #{operator2_forward.1} parent=11 // pred_fallthru
        _
    $region12: #{operator2_forward.1} parent=5 // pred_fallthru
      _
    %p124 = scmp.lt.s32.totalorder %s9, 2
    // Predicated region
    $region21: #{operator2_forward.1} parent=5 // pred_check
      %p125 = pneg %p124
    $region22: #{operator2_forward.1} parent=5 // pred_check_branch
      %127 = sbr.rel (%p125) target = $region24
    $region23: #{operator2_forward.1} parent=5 // pred_region
      // Predicated region
      $region25: #{operator2_forward.1} parent=23 // pred_check
        %p128 = pneg %p29
      $region26: #{operator2_forward.1} parent=23 // pred_check_branch
        %130 = sbr.rel (%p128) target = $region28
      $region27: #{operator2_forward.1} parent=23 // pred_region
        %s131 = smul.u32 128, %s9
        %p132 = scmp.lt.s32.totalorder %s131, 255
        %s133 = scalar_select %p132, %s131, 255
        %s134 = smul.addr %s133, 8
        %s135 = scalar_lea.vmem %s0, %s134
        %s136 = smul.u32 128, %s9
      $region28: #{operator2_forward.1} parent=23 // pred_fallthru
        _
    $region24: #{operator2_forward.1} parent=5 // pred_fallthru
      _
    %p137 = scmp.le.s32.totalorder 1, %s9
    %p138 = scmp.lt.s32.totalorder %s9, 3
    %p139 = pnand %p137, %p138
    %p140 = pneg %p139
    // Predicated region
    $region29: #{operator2_forward.1} parent=5 // pred_check
      _
    $region30: #{operator2_forward.1} parent=5 // pred_check_branch
      %142 = sbr.rel (%p139) target = $region32
    $region31: #{operator2_forward.1} parent=5 // pred_region
      %s143 = ssub.s32 %s9, 1
      %s144 = smul.u32 128, %s14
      %p145 = scmp.lt.s32.totalorder %s144, 255
      %s146 = scalar_select %p145, %s144, 255
      %s147 = smul.addr %s146, 8
      %s148 = scalar_lea.vmem %s0, %s147
      %p149 = pneg %p35
      %p150 = pneg %p32
      %p151 = pneg %p56
      %p152 = pneg %p53
      %p153 = pneg %p77
      %p154 = pneg %p74
      %p155 = pneg %p103
      %p156 = pneg %p100
      %s157 = smul.u32 128, %s14
      %p158 = scmp.lt.s32.totalorder %s157, 255
      %s159 = scalar_select %p158, %s157, 255
      %s160 = smul.addr %s159, 8
      %s161 = scalar_lea.vmem %s3, %s160
      %s162 = smul.u32 128, %s14
      %p163 = scmp.lt.s32.totalorder %s162, 255
      %s164 = scalar_select %p163, %s162, 255
      %s165 = smul.addr %s164, 8
      %s166 = scalar_lea.vmem %s0, %s165
      %s167 = smul.u32 128, %s14
      %s168 = smul.u32 128, %s14
      %p169 = scmp.lt.s32.totalorder %s168, 255
      %s170 = scalar_select %p169, %s168, 255
      %s171 = smul.addr %s170, 8
      %s172 = scalar_lea.vmem %s3, %s171
      %s173 = smul.u32 128, %s14
      %v174 = vld [vmem:[%s1] sm:$0xff]
      %v175 = vld [vmem:[%s1 + $0x8] sm:$0xff]
      %v176 = vld [vmem:[%s2] sm:$0xff]
      %v177 = vld [vmem:[%s2 + $0x8] sm:$0xff]
      %v178 = vld [vmem:[%s2 + $0x10] sm:$0xff]
      %v179 = vld [vmem:[%s2 + $0x18] sm:$0xff]
      %v180 = vld [vmem:[%s2 + $0x20] sm:$0xff]
      %v181 = vld [vmem:[%s2 + $0x28] sm:$0xff]
      %v182 = vld [vmem:[%s2 + $0x30] sm:$0xff]
      %v183 = vld [vmem:[%s2 + $0x38] sm:$0xff]
      %v184 = vld [vmem:[%s2 + $0x40] sm:$0xff]
      %v185 = vld [vmem:[%s2 + $0x48] sm:$0xff]
      %v186 = vld [vmem:[%s2 + $0x50] sm:$0xff]
      %v187 = vld [vmem:[%s2 + $0x58] sm:$0xff]
      %v188 = vld [vmem:[%s2 + $0x60] sm:$0xff]
      %v189 = vld [vmem:[%s2 + $0x68] sm:$0xff]
      %v190 = vld [vmem:[%s2 + $0x70] sm:$0xff]
      %v191 = vld [vmem:[%s2 + $0x78] sm:$0xff]
      %v192 = vld [vmem:[%s2 + $0x80] sm:$0xff]
      %v193 = vld [vmem:[%s2 + $0x88] sm:$0xff]
      %v194 = vld [vmem:[%s2 + $0x90] sm:$0xff]
      %v195 = vld [vmem:[%s2 + $0x98] sm:$0xff]
      %v196 = vld [vmem:[%s2 + $0xa0] sm:$0xff]
      %v197 = vld [vmem:[%s2 + $0xa8] sm:$0xff]
      %v198 = vld [vmem:[%s2 + $0xb0] sm:$0xff]
      %v199 = vld [vmem:[%s2 + $0xb8] sm:$0xff]
      %v200 = vld [vmem:[%s2 + $0xc0] sm:$0xff]
      %v201 = vld [vmem:[%s2 + $0xc8] sm:$0xff]
      %v202 = vld [vmem:[%s2 + $0xd0] sm:$0xff]
      %v203 = vld [vmem:[%s2 + $0xd8] sm:$0xff]
      %v204 = vld [vmem:[%s2 + $0xe0] sm:$0xff]
      %v205 = vld [vmem:[%s2 + $0xe8] sm:$0xff]
      %v206 = vld [vmem:[%s2 + $0xf0] sm:$0xff]
      %v207 = vld [vmem:[%s2 + $0xf8] sm:$0xff]
      %v208 = vld [vmem:[%s2 + $0x100] sm:$0xff]
      %v209 = vld [vmem:[%s2 + $0x108] sm:$0xff]
      %v210 = vld [vmem:[%s2 + $0x110] sm:$0xff]
      %v211 = vld [vmem:[%s2 + $0x118] sm:$0xff]
      %v212 = vld [vmem:[%s2 + $0x120] sm:$0xff]
      %v213 = vld [vmem:[%s2 + $0x128] sm:$0xff]
      %v214 = vld [vmem:[%s2 + $0x130] sm:$0xff]
      %v215 = vld [vmem:[%s2 + $0x138] sm:$0xff]
      %v216 = vld [vmem:[%s2 + $0x140] sm:$0xff]
      %v217 = vld [vmem:[%s2 + $0x148] sm:$0xff]
      %v218 = vld [vmem:[%s2 + $0x150] sm:$0xff]
      %v219 = vld [vmem:[%s2 + $0x158] sm:$0xff]
      %v220 = vld [vmem:[%s2 + $0x160] sm:$0xff]
      %v221 = vld [vmem:[%s2 + $0x168] sm:$0xff]
      %v222 = vld [vmem:[%s2 + $0x170] sm:$0xff]
      %v223 = vld [vmem:[%s2 + $0x178] sm:$0xff]
      %v224 = vld [vmem:[%s2 + $0x180] sm:$0xff]
      %v225 = vld [vmem:[%s2 + $0x188] sm:$0xff]
      %v226 = vld [vmem:[%s2 + $0x190] sm:$0xff]
      %v227 = vld [vmem:[%s2 + $0x198] sm:$0xff]
      %v228 = vld [vmem:[%s2 + $0x1a0] sm:$0xff]
      %v229 = vld [vmem:[%s2 + $0x1a8] sm:$0xff]
      %v230 = vld [vmem:[%s2 + $0x1b0] sm:$0xff]
      %v231 = vld [vmem:[%s2 + $0x1b8] sm:$0xff]
      %v232 = vld [vmem:[%s2 + $0x1c0] sm:$0xff]
      %v233 = vld [vmem:[%s2 + $0x1c8] sm:$0xff]
      %v234 = vld [vmem:[%s2 + $0x1d0] sm:$0xff]
      %v235 = vld [vmem:[%s2 + $0x1d8] sm:$0xff]
      %v236 = vld [vmem:[%s2 + $0x1e0] sm:$0xff]
      %v237 = vld [vmem:[%s2 + $0x1e8] sm:$0xff]
      %v238 = vld [vmem:[%s2 + $0x1f0] sm:$0xff]
      %v239 = vld [vmem:[%s2 + $0x1f8] sm:$0xff]
      %v240 = vld [vmem:[%s166] sm:$0xff]
      %v241 = vld [vmem:[%s166 + $0x8] sm:$0xff]
      %v242 = vld [vmem:[%s166 + $0x10] sm:$0xff]
      %v243 = vld [vmem:[%s166 + $0x18] sm:$0xff]
      %v244 = vld [vmem:[%s166 + $0x20] sm:$0xff]
      %v245 = vld [vmem:[%s166 + $0x28] sm:$0xff]
      %v246 = vld [vmem:[%s166 + $0x30] sm:$0xff]
      %v247 = vld [vmem:[%s166 + $0x38] sm:$0xff]
      %v248 = vld [vmem:[%s166 + $0x40] sm:$0xff]
      %v249 = vld [vmem:[%s166 + $0x48] sm:$0xff]
      %v250 = vld [vmem:[%s166 + $0x50] sm:$0xff]
      %v251 = vld [vmem:[%s166 + $0x58] sm:$0xff]
      %v252 = vld [vmem:[%s166 + $0x60] sm:$0xff]
      %v253 = vld [vmem:[%s166 + $0x68] sm:$0xff]
      %v254 = vld [vmem:[%s166 + $0x70] sm:$0xff]
      %v255 = vld [vmem:[%s166 + $0x78] sm:$0xff]
      %v256 = vld [vmem:[%s166 + $0x80] sm:$0xff]
      %v257 = vld [vmem:[%s166 + $0x88] sm:$0xff]
      %v258 = vld [vmem:[%s166 + $0x90] sm:$0xff]
      %v259 = vld [vmem:[%s166 + $0x98] sm:$0xff]
      %v260 = vld [vmem:[%s166 + $0xa0] sm:$0xff]
      %v261 = vld [vmem:[%s166 + $0xa8] sm:$0xff]
      %v262 = vld [vmem:[%s166 + $0xb0] sm:$0xff]
      %v263 = vld [vmem:[%s166 + $0xb8] sm:$0xff]
      %v264 = vld [vmem:[%s166 + $0xc0] sm:$0xff]
      %v265 = vld [vmem:[%s166 + $0xc8] sm:$0xff]
      %v266 = vld [vmem:[%s166 + $0xd0] sm:$0xff]
      %v267 = vld [vmem:[%s166 + $0xd8] sm:$0xff]
      %v268 = vld [vmem:[%s166 + $0xe0] sm:$0xff]
      %v269 = vld [vmem:[%s166 + $0xe8] sm:$0xff]
      %v270 = vld [vmem:[%s166 + $0xf0] sm:$0xff]
      %v271 = vld [vmem:[%s166 + $0xf8] sm:$0xff]
      %v272 = vld [vmem:[%s166 + $0x100] sm:$0xff]
      %v273 = vld [vmem:[%s166 + $0x108] sm:$0xff]
      %v274 = vld [vmem:[%s166 + $0x110] sm:$0xff]
      %v275 = vld [vmem:[%s166 + $0x118] sm:$0xff]
      %v276 = vld [vmem:[%s166 + $0x120] sm:$0xff]
      %v277 = vld [vmem:[%s166 + $0x128] sm:$0xff]
      %v278 = vld [vmem:[%s166 + $0x130] sm:$0xff]
      %v279 = vld [vmem:[%s166 + $0x138] sm:$0xff]
      %v280 = vld [vmem:[%s166 + $0x140] sm:$0xff]
      %v281 = vld [vmem:[%s166 + $0x148] sm:$0xff]
      %v282 = vld [vmem:[%s166 + $0x150] sm:$0xff]
      %v283 = vld [vmem:[%s166 + $0x158] sm:$0xff]
      %v284 = vld [vmem:[%s166 + $0x160] sm:$0xff]
      %v285 = vld [vmem:[%s166 + $0x168] sm:$0xff]
      %v286 = vld [vmem:[%s166 + $0x170] sm:$0xff]
      %v287 = vld [vmem:[%s166 + $0x178] sm:$0xff]
      %v288 = vld [vmem:[%s166 + $0x180] sm:$0xff]
      %v289 = vld [vmem:[%s166 + $0x188] sm:$0xff]
      %v290 = vld [vmem:[%s166 + $0x190] sm:$0xff]
      %v291 = vld [vmem:[%s166 + $0x198] sm:$0xff]
      %v292 = vld [vmem:[%s166 + $0x1a0] sm:$0xff]
      %v293 = vld [vmem:[%s166 + $0x1a8] sm:$0xff]
      %v294 = vld [vmem:[%s166 + $0x1b0] sm:$0xff]
      %v295 = vld [vmem:[%s166 + $0x1b8] sm:$0xff]
      %v296 = vld [vmem:[%s166 + $0x1c0] sm:$0xff]
      %v297 = vld [vmem:[%s166 + $0x1c8] sm:$0xff]
      %v298 = vld [vmem:[%s166 + $0x1d0] sm:$0xff]
      %v299 = vld [vmem:[%s166 + $0x1d8] sm:$0xff]
      %v300 = vld [vmem:[%s166 + $0x1e0] sm:$0xff]
      %v301 = vld [vmem:[%s166 + $0x1e8] sm:$0xff]
      %v302 = vld [vmem:[%s166 + $0x1f0] sm:$0xff]
      %v303 = vld [vmem:[%s166 + $0x1f8] sm:$0xff]
      %v304 = vld [vmem:[%s166 + $0x200] sm:$0xff]
      %v305 = vld [vmem:[%s166 + $0x208] sm:$0xff]
      %v306 = vld [vmem:[%s166 + $0x210] sm:$0xff]
      %v307 = vld [vmem:[%s166 + $0x218] sm:$0xff]
      %v308 = vld [vmem:[%s166 + $0x220] sm:$0xff]
      %v309 = vld [vmem:[%s166 + $0x228] sm:$0xff]
      %v310 = vld [vmem:[%s166 + $0x230] sm:$0xff]
      %v311 = vld [vmem:[%s166 + $0x238] sm:$0xff]
      %v312 = vld [vmem:[%s166 + $0x240] sm:$0xff]
      %v313 = vld [vmem:[%s166 + $0x248] sm:$0xff]
      %v314 = vld [vmem:[%s166 + $0x250] sm:$0xff]
      %v315 = vld [vmem:[%s166 + $0x258] sm:$0xff]
      %v316 = vld [vmem:[%s166 + $0x260] sm:$0xff]
      %v317 = vld [vmem:[%s166 + $0x268] sm:$0xff]
      %v318 = vld [vmem:[%s166 + $0x270] sm:$0xff]
      %v319 = vld [vmem:[%s166 + $0x278] sm:$0xff]
      %v320 = vld [vmem:[%s166 + $0x280] sm:$0xff]
      %v321 = vld [vmem:[%s166 + $0x288] sm:$0xff]
      %v322 = vld [vmem:[%s166 + $0x290] sm:$0xff]
      %v323 = vld [vmem:[%s166 + $0x298] sm:$0xff]
      %v324 = vld [vmem:[%s166 + $0x2a0] sm:$0xff]
      %v325 = vld [vmem:[%s166 + $0x2a8] sm:$0xff]
      %v326 = vld [vmem:[%s166 + $0x2b0] sm:$0xff]
      %v327 = vld [vmem:[%s166 + $0x2b8] sm:$0xff]
      %v328 = vld [vmem:[%s166 + $0x2c0] sm:$0xff]
      %v329 = vld [vmem:[%s166 + $0x2c8] sm:$0xff]
      %v330 = vld [vmem:[%s166 + $0x2d0] sm:$0xff]
      %v331 = vld [vmem:[%s166 + $0x2d8] sm:$0xff]
      %v332 = vld [vmem:[%s166 + $0x2e0] sm:$0xff]
      %v333 = vld [vmem:[%s166 + $0x2e8] sm:$0xff]
      %v334 = vld [vmem:[%s166 + $0x2f0] sm:$0xff]
      %v335 = vld [vmem:[%s166 + $0x2f8] sm:$0xff]
      %v336 = vld [vmem:[%s166 + $0x300] sm:$0xff]
      %v337 = vld [vmem:[%s166 + $0x308] sm:$0xff]
      %v338 = vld [vmem:[%s166 + $0x310] sm:$0xff]
      %v339 = vld [vmem:[%s166 + $0x318] sm:$0xff]
      %v340 = vld [vmem:[%s166 + $0x320] sm:$0xff]
      %v341 = vld [vmem:[%s166 + $0x328] sm:$0xff]
      %v342 = vld [vmem:[%s166 + $0x330] sm:$0xff]
      %v343 = vld [vmem:[%s166 + $0x338] sm:$0xff]
      %v344 = vld [vmem:[%s166 + $0x340] sm:$0xff]
      %v345 = vld [vmem:[%s166 + $0x348] sm:$0xff]
      %v346 = vld [vmem:[%s166 + $0x350] sm:$0xff]
      %v347 = vld [vmem:[%s166 + $0x358] sm:$0xff]
      %v348 = vld [vmem:[%s166 + $0x360] sm:$0xff]
      %v349 = vld [vmem:[%s166 + $0x368] sm:$0xff]
      %v350 = vld [vmem:[%s166 + $0x370] sm:$0xff]
      %v351 = vld [vmem:[%s166 + $0x378] sm:$0xff]
      %v352 = vld [vmem:[%s166 + $0x380] sm:$0xff]
      %v353 = vld [vmem:[%s166 + $0x388] sm:$0xff]
      %v354 = vld [vmem:[%s166 + $0x390] sm:$0xff]
      %v355 = vld [vmem:[%s166 + $0x398] sm:$0xff]
      %v356 = vld [vmem:[%s166 + $0x3a0] sm:$0xff]
      %v357 = vld [vmem:[%s166 + $0x3a8] sm:$0xff]
      %v358 = vld [vmem:[%s166 + $0x3b0] sm:$0xff]
      %v359 = vld [vmem:[%s166 + $0x3b8] sm:$0xff]
      %v360 = vld [vmem:[%s166 + $0x3c0] sm:$0xff]
      %v361 = vld [vmem:[%s166 + $0x3c8] sm:$0xff]
      %v362 = vld [vmem:[%s166 + $0x3d0] sm:$0xff]
      %v363 = vld [vmem:[%s166 + $0x3d8] sm:$0xff]
      %v364 = vld [vmem:[%s166 + $0x3e0] sm:$0xff]
      %v365 = vld [vmem:[%s166 + $0x3e8] sm:$0xff]
      %v366 = vld [vmem:[%s166 + $0x3f0] sm:$0xff]
      %v367 = vld [vmem:[%s166 + $0x3f8] sm:$0xff]
      %vm368 = vcmask 130048
      %v370 = vsel %vm368, %v240, 0
      %v373 = vsel %vm368, %v241, 0
      %v376 = vsel %vm368, %v242, 0
      %v379 = vsel %vm368, %v243, 0
      %v382 = vsel %vm368, %v244, 0
      %v385 = vsel %vm368, %v245, 0
      %v388 = vsel %vm368, %v246, 0
      %v391 = vsel %vm368, %v247, 0
      %v394 = vsel %vm368, %v248, 0
      %v397 = vsel %vm368, %v249, 0
      %v400 = vsel %vm368, %v250, 0
      %v403 = vsel %vm368, %v251, 0
      %v406 = vsel %vm368, %v252, 0
      %v409 = vsel %vm368, %v253, 0
      %v412 = vsel %vm368, %v254, 0
      %v415 = vsel %vm368, %v255, 0
      %v418 = vsel %vm368, %v256, 0
      %v421 = vsel %vm368, %v257, 0
      %v424 = vsel %vm368, %v258, 0
      %v427 = vsel %vm368, %v259, 0
      %v430 = vsel %vm368, %v260, 0
      %v433 = vsel %vm368, %v261, 0
      %v436 = vsel %vm368, %v262, 0
      %v439 = vsel %vm368, %v263, 0
      %v442 = vsel %vm368, %v264, 0
      %v445 = vsel %vm368, %v265, 0
      %v448 = vsel %vm368, %v266, 0
      %v451 = vsel %vm368, %v267, 0
      %v454 = vsel %vm368, %v268, 0
      %v457 = vsel %vm368, %v269, 0
      %v460 = vsel %vm368, %v270, 0
      %v463 = vsel %vm368, %v271, 0
      %v466 = vsel %vm368, %v272, 0
      %v469 = vsel %vm368, %v273, 0
      %v472 = vsel %vm368, %v274, 0
      %v475 = vsel %vm368, %v275, 0
      %v478 = vsel %vm368, %v276, 0
      %v481 = vsel %vm368, %v277, 0
      %v484 = vsel %vm368, %v278, 0
      %v487 = vsel %vm368, %v279, 0
      %v490 = vsel %vm368, %v280, 0
      %v493 = vsel %vm368, %v281, 0
      %v496 = vsel %vm368, %v282, 0
      %v499 = vsel %vm368, %v283, 0
      %v502 = vsel %vm368, %v284, 0
      %v505 = vsel %vm368, %v285, 0
      %v508 = vsel %vm368, %v286, 0
      %v511 = vsel %vm368, %v287, 0
      %v514 = vsel %vm368, %v288, 0
      %v517 = vsel %vm368, %v289, 0
      %v520 = vsel %vm368, %v290, 0
      %v523 = vsel %vm368, %v291, 0
      %v526 = vsel %vm368, %v292, 0
      %v529 = vsel %vm368, %v293, 0
      %v532 = vsel %vm368, %v294, 0
      %v535 = vsel %vm368, %v295, 0
      %v538 = vsel %vm368, %v296, 0
      %v541 = vsel %vm368, %v297, 0
      %v544 = vsel %vm368, %v298, 0
      %v547 = vsel %vm368, %v299, 0
      %v550 = vsel %vm368, %v300, 0
      %v553 = vsel %vm368, %v301, 0
      %v556 = vsel %vm368, %v302, 0
      %v559 = vsel %vm368, %v303, 0
      %v562 = vsel %vm368, %v304, 0
      %v565 = vsel %vm368, %v305, 0
      %v568 = vsel %vm368, %v306, 0
      %v571 = vsel %vm368, %v307, 0
      %v574 = vsel %vm368, %v308, 0
      %v577 = vsel %vm368, %v309, 0
      %v580 = vsel %vm368, %v310, 0
      %v583 = vsel %vm368, %v311, 0
      %v586 = vsel %vm368, %v312, 0
      %v589 = vsel %vm368, %v313, 0
      %v592 = vsel %vm368, %v314, 0
      %v595 = vsel %vm368, %v315, 0
      %v598 = vsel %vm368, %v316, 0
      %v601 = vsel %vm368, %v317, 0
      %v604 = vsel %vm368, %v318, 0
      %v607 = vsel %vm368, %v319, 0
      %v610 = vsel %vm368, %v320, 0
      %v613 = vsel %vm368, %v321, 0
      %v616 = vsel %vm368, %v322, 0
      %v619 = vsel %vm368, %v323, 0
      %v622 = vsel %vm368, %v324, 0
      %v625 = vsel %vm368, %v325, 0
      %v628 = vsel %vm368, %v326, 0
      %v631 = vsel %vm368, %v327, 0
      %v634 = vsel %vm368, %v328, 0
      %v637 = vsel %vm368, %v329, 0
      %v640 = vsel %vm368, %v330, 0
      %v643 = vsel %vm368, %v331, 0
      %v646 = vsel %vm368, %v332, 0
      %v649 = vsel %vm368, %v333, 0
      %v652 = vsel %vm368, %v334, 0
      %v655 = vsel %vm368, %v335, 0
      %v658 = vsel %vm368, %v336, 0
      %v661 = vsel %vm368, %v337, 0
      %v664 = vsel %vm368, %v338, 0
      %v667 = vsel %vm368, %v339, 0
      %v670 = vsel %vm368, %v340, 0
      %v673 = vsel %vm368, %v341, 0
      %v676 = vsel %vm368, %v342, 0
      %v679 = vsel %vm368, %v343, 0
      %v682 = vsel %vm368, %v344, 0
      %v685 = vsel %vm368, %v345, 0
      %v688 = vsel %vm368, %v346, 0
      %v691 = vsel %vm368, %v347, 0
      %v694 = vsel %vm368, %v348, 0
      %v697 = vsel %vm368, %v349, 0
      %v700 = vsel %vm368, %v350, 0
      %v703 = vsel %vm368, %v351, 0
      %v706 = vsel %vm368, %v352, 0
      %v709 = vsel %vm368, %v353, 0
      %v712 = vsel %vm368, %v354, 0
      %v715 = vsel %vm368, %v355, 0
      %v718 = vsel %vm368, %v356, 0
      %v721 = vsel %vm368, %v357, 0
      %v724 = vsel %vm368, %v358, 0
      %v727 = vsel %vm368, %v359, 0
      %v730 = vsel %vm368, %v360, 0
      %v733 = vsel %vm368, %v361, 0
      %v736 = vsel %vm368, %v362, 0
      %v739 = vsel %vm368, %v363, 0
      %v742 = vsel %vm368, %v364, 0
      %v745 = vsel %vm368, %v365, 0
      %v748 = vsel %vm368, %v366, 0
      %v751 = vsel %vm368, %v367, 0
      %753 = vmatprep.subr.mxu0 0.0
      %754 = vmatpush1.msra.mxu0 %v174
      %755 = vmatprep.subr.mxu0 0.0
      %756 = vmatpush1.msra.mxu0 %v175
      %757 = vmatprep.subr.mxu0 0.0
      %758 = vmatpush1.msra.mxu0 0.0
      %759 = vmatprep.subr.mxu0 0.0
      %760 = vmatpush1.msra.mxu0 0.0
      %761 = vmatprep.subr.mxu0 0.0
      %762 = vmatpush1.msra.mxu0 0.0
      %763 = vmatprep.subr.mxu0 0.0
      %764 = vmatpush1.msra.mxu0 0.0
      %765 = vmatprep.subr.mxu0 0.0
      %766 = vmatpush1.msra.mxu0 0.0
      %767 = vmatprep.subr.mxu0 0.0
      %768 = vmatpush1.msra.mxu0 0.0
      %769 = vmatprep.subr.mxu0 0.0
      %770 = vmatpush1.msra.mxu0 0.0
      %771 = vmatprep.subr.mxu0 0.0
      %772 = vmatpush1.msra.mxu0 0.0
      %773 = vmatprep.subr.mxu0 0.0
      %774 = vmatpush1.msra.mxu0 0.0
      %775 = vmatprep.subr.mxu0 0.0
      %776 = vmatpush1.msra.mxu0 0.0
      %777 = vmatprep.subr.mxu0 0.0
      %778 = vmatpush1.msra.mxu0 0.0
      %779 = vmatprep.subr.mxu0 0.0
      %780 = vmatpush1.msra.mxu0 0.0
      %781 = vmatprep.subr.mxu0 0.0
      %782 = vmatpush1.msra.mxu0 0.0
      %783 = vmatprep.subr.mxu0 0.0
      %784 = vmatpush1.msra.mxu0 0.0
      %785 = vmatprep.subr.mxu0 0.0
      %786 = vmatpush1.msra.mxu0 0.0
      %787 = vmatprep.subr.mxu0 0.0
      %788 = vmatpush1.msra.mxu0 0.0
      %789 = vmatprep.subr.mxu0 0.0
      %790 = vmatpush1.msra.mxu0 0.0
      %791 = vmatprep.subr.mxu0 0.0
      %792 = vmatpush1.msra.mxu0 0.0
      %793 = vmatprep.subr.mxu0 0.0
      %794 = vmatpush1.msra.mxu0 0.0
      %795 = vmatprep.subr.mxu0 0.0
      %796 = vmatpush1.msra.mxu0 0.0
      %797 = vmatprep.subr.mxu0 0.0
      %798 = vmatpush1.msra.mxu0 0.0
      %799 = vmatprep.subr.mxu0 0.0
      %800 = vmatpush1.msra.mxu0 0.0
      %801 = vmatprep.subr.mxu0 0.0
      %802 = vmatpush1.msra.mxu0 0.0
      %803 = vmatprep.subr.mxu0 0.0
      %804 = vmatpush1.msra.mxu0 0.0
      %805 = vmatprep.subr.mxu0 0.0
      %806 = vmatpush1.msra.mxu0 0.0
      %807 = vmatprep.subr.mxu0 0.0
      %808 = vmatpush1.msra.mxu0 0.0
      %809 = vmatprep.subr.mxu0 0.0
      %810 = vmatpush1.msra.mxu0 0.0
      %811 = vmatprep.subr.mxu0 0.0
      %812 = vmatpush1.msra.mxu0 0.0
      %813 = vmatprep.subr.mxu0 0.0
      %814 = vmatpush1.msra.mxu0 0.0
      %815 = vmatprep.subr.mxu0 0.0
      %816 = vmatpush1.msra.mxu0 0.0
      %817 = vmatprep.mubr.f32.mxu0 0.0
      %818 = vmatmul.mubr.f32.gmra.mrb[0].mxu0 %v370
      %v819 = vpop.f32.mrb[0].mxu0
      %v820 = vadd.f32 0.0, %v819
      %v821 = vpop.f32.mrb[0].mxu0
      %822 = vmatprep.mubr.f32.mxu0 0.0
      %823 = vmatmul.mubr.f32.gmra.mrb[0].mxu0 %v373
      %v824 = vpop.f32.mrb[0].mxu0
      %v825 = vadd.f32 0.0, %v824
      %v826 = vpop.f32.mrb[0].mxu0
      %827 = vmatprep.mubr.f32.mxu0 0.0
      %828 = vmatmul.mubr.f32.gmra.mrb[0].mxu0 %v376
      %v829 = vpop.f32.mrb[0].mxu0
      %v830 = vadd.f32 0.0, %v829
      %v831 = vpop.f32.mrb[0].mxu0
      %832 = vmatprep.mubr.f32.mxu0 0.0
      %833 = vmatmul.mubr.f32.gmra.mrb[0].mxu0 %v379
      %v834 = vpop.f32.mrb[0].mxu0
      %v835 = vadd.f32 0.0, %v834
      %v836 = vpop.f32.mrb[0].mxu0
      %837 = vmatprep.mubr.f32.mxu0 0.0
      %838 = vmatmul.mubr.f32.gmra.mrb[0].mxu0 %v382
      %v839 = vpop.f32.mrb[0].mxu0
      %v840 = vadd.f32 0.0, %v839
      %v841 = vpop.f32.mrb[0].mxu0
      %842 = vmatprep.mubr.f32.mxu0 0.0
      %843 = vmatmul.mubr.f32.gmra.mrb[0].mxu0 %v385
      %v844 = vpop.f32.mrb[0].mxu0
      %v845 = vadd.f32 0.0, %v844
      %v846 = vpop.f32.mrb[0].mxu0
      %847 = vmatprep.mubr.f32.mxu0 0.0
      %848 = vmatmul.mubr.f32.gmra.mrb[0].mxu0 %v388
      %v849 = vpop.f32.mrb[0].mxu0
      %v850 = vadd.f32 0.0, %v849
      %v851 = vpop.f32.mrb[0].mxu0
      %852 = vmatprep.mubr.f32.mxu0 0.0
      %853 = vmatmul.mubr.f32.gmra.mrb[0].mxu0 %v391
      %v854 = vpop.f32.mrb[0].mxu0
      %v855 = vadd.f32 0.0, %v854
      %v856 = vpop.f32.mrb[0].mxu0
      %857 = vmatprep.mubr.f32.mxu0 0.0
      %858 = vmatmul.mubr.f32.gmra.mrb[0].mxu0 %v394
      %v859 = vpop.f32.mrb[0].mxu0
      %v860 = vadd.f32 0.0, %v859
      %v861 = vpop.f32.mrb[0].mxu0
      %862 = vmatprep.mubr.f32.mxu0 0.0
      %863 = vmatmul.mubr.f32.gmra.mrb[0].mxu0 %v397
      %v864 = vpop.f32.mrb[0].mxu0
      %v865 = vadd.f32 0.0, %v864
      %v866 = vpop.f32.mrb[0].mxu0
      %867 = vmatprep.mubr.f32.mxu0 0.0
      %868 = vmatmul.mubr.f32.gmra.mrb[0].mxu0 %v400
      %v869 = vpop.f32.mrb[0].mxu0
      %v870 = vadd.f32 0.0, %v869
      %v871 = vpop.f32.mrb[0].mxu0
      %872 = vmatprep.mubr.f32.mxu0 0.0
      %873 = vmatmul.mubr.f32.gmra.mrb[0].mxu0 %v403
      %v874 = vpop.f32.mrb[0].mxu0
      %v875 = vadd.f32 0.0, %v874
      %v876 = vpop.f32.mrb[0].mxu0
      %877 = vmatprep.mubr.f32.mxu0 0.0
      %878 = vmatmul.mubr.f32.gmra.mrb[0].mxu0 %v406
      %v879 = vpop.f32.mrb[0].mxu0
      %v880 = vadd.f32 0.0, %v879
      %v881 = vpop.f32.mrb[0].mxu0
      %882 = vmatprep.mubr.f32.mxu0 0.0
      %883 = vmatmul.mubr.f32.gmra.mrb[0].mxu0 %v409
      %v884 = vpop.f32.mrb[0].mxu0
      %v885 = vadd.f32 0.0, %v884
      %v886 = vpop.f32.mrb[0].mxu0
      %887 = vmatprep.mubr.f32.mxu0 0.0
      %888 = vmatmul.mubr.f32.gmra.mrb[0].mxu0 %v412
      %v889 = vpop.f32.mrb[0].mxu0
      %v890 = vadd.f32 0.0, %v889
      %v891 = vpop.f32.mrb[0].mxu0
      %892 = vmatprep.mubr.f32.mxu0 0.0
      %893 = vmatmul.mubr.f32.gmra.mrb[0].mxu0 %v415
      %v894 = vpop.f32.mrb[0].mxu0
      %v895 = vadd.f32 0.0, %v894
      %v896 = vpop.f32.mrb[0].mxu0
      %897 = vmatprep.mubr.f32.mxu0 0.0
      %898 = vmatmul.mubr.f32.gmra.mrb[0].mxu0 %v418
      %v899 = vpop.f32.mrb[0].mxu0
      %v900 = vadd.f32 0.0, %v899
      %v901 = vpop.f32.mrb[0].mxu0
      %902 = vmatprep.mubr.f32.mxu0 0.0
      %903 = vmatmul.mubr.f32.gmra.mrb[0].mxu0 %v421
      %v904 = vpop.f32.mrb[0].mxu0
      %v905 = vadd.f32 0.0, %v904
      %v906 = vpop.f32.mrb[0].mxu0
      %907 = vmatprep.mubr.f32.mxu0 0.0
      %908 = vmatmul.mubr.f32.gmra.mrb[0].mxu0 %v424
      %v909 = vpop.f32.mrb[0].mxu0
      %v910 = vadd.f32 0.0, %v909
      %v911 = vpop.f32.mrb[0].mxu0
      %912 = vmatprep.mubr.f32.mxu0 0.0
      %913 = vmatmul.mubr.f32.gmra.mrb[0].mxu0 %v427
      %v914 = vpop.f32.mrb[0].mxu0
      %v915 = vadd.f32 0.0, %v914
      %v916 = vpop.f32.mrb[0].mxu0
      %917 = vmatprep.mubr.f32.mxu0 0.0
      %918 = vmatmul.mubr.f32.gmra.mrb[0].mxu0 %v430
      %v919 = vpop.f32.mrb[0].mxu0
      %v920 = vadd.f32 0.0, %v919
      %v921 = vpop.f32.mrb[0].mxu0
      %922 = vmatprep.mubr.f32.mxu0 0.0
      %923 = vmatmul.mubr.f32.gmra.mrb[0].mxu0 %v433
      %v924 = vpop.f32.mrb[0].mxu0
      %v925 = vadd.f32 0.0, %v924
      %v926 = vpop.f32.mrb[0].mxu0
      %927 = vmatprep.mubr.f32.mxu0 0.0
      %928 = vmatmul.mubr.f32.gmra.mrb[0].mxu0 %v436
      %v929 = vpop.f32.mrb[0].mxu0
      %v930 = vadd.f32 0.0, %v929
      %v931 = vpop.f32.mrb[0].mxu0
      %932 = vmatprep.mubr.f32.mxu0 0.0
      %933 = vmatmul.mubr.f32.gmra.mrb[0].mxu0 %v439
      %v934 = vpop.f32.mrb[0].mxu0
      %v935 = vadd.f32 0.0, %v934
      %v936 = vpop.f32.mrb[0].mxu0
      %937 = vmatprep.mubr.f32.mxu0 0.0
      %938 = vmatmul.mubr.f32.gmra.mrb[0].mxu0 %v442
      %v939 = vpop.f32.mrb[0].mxu0
      %v940 = vadd.f32 0.0, %v939
      %v941 = vpop.f32.mrb[0].mxu0
      %942 = vmatprep.mubr.f32.mxu0 0.0
      %943 = vmatmul.mubr.f32.gmra.mrb[0].mxu0 %v445
      %v944 = vpop.f32.mrb[0].mxu0
      %v945 = vadd.f32 0.0, %v944
      %v946 = vpop.f32.mrb[0].mxu0
      %947 = vmatprep.mubr.f32.mxu0 0.0
      %948 = vmatmul.mubr.f32.gmra.mrb[0].mxu0 %v448
      %v949 = vpop.f32.mrb[0].mxu0
      %v950 = vadd.f32 0.0, %v949
      %v951 = vpop.f32.mrb[0].mxu0
      %952 = vmatprep.mubr.f32.mxu0 0.0
      %953 = vmatmul.mubr.f32.gmra.mrb[0].mxu0 %v451
      %v954 = vpop.f32.mrb[0].mxu0
      %v955 = vadd.f32 0.0, %v954
      %v956 = vpop.f32.mrb[0].mxu0
      %957 = vmatprep.mubr.f32.mxu0 0.0
      %958 = vmatmul.mubr.f32.gmra.mrb[0].mxu0 %v454
      %v959 = vpop.f32.mrb[0].mxu0
      %v960 = vadd.f32 0.0, %v959
      %v961 = vpop.f32.mrb[0].mxu0
      %962 = vmatprep.mubr.f32.mxu0 0.0
      %963 = vmatmul.mubr.f32.gmra.mrb[0].mxu0 %v457
      %v964 = vpop.f32.mrb[0].mxu0
      %v965 = vadd.f32 0.0, %v964
      %v966 = vpop.f32.mrb[0].mxu0
      %967 = vmatprep.mubr.f32.mxu0 0.0
      %968 = vmatmul.mubr.f32.gmra.mrb[0].mxu0 %v460
      %v969 = vpop.f32.mrb[0].mxu0
      %v970 = vadd.f32 0.0, %v969
      %v971 = vpop.f32.mrb[0].mxu0
      %972 = vmatprep.mubr.f32.mxu0 0.0
      %973 = vmatmul.mubr.f32.gmra.mrb[0].mxu0 %v463
      %v974 = vpop.f32.mrb[0].mxu0
      %v975 = vadd.f32 0.0, %v974
      %v976 = vpop.f32.mrb[0].mxu0
      %977 = vmatprep.mubr.f32.mxu0 0.0
      %978 = vmatmul.mubr.f32.gmra.mrb[0].mxu0 %v466
      %v979 = vpop.f32.mrb[0].mxu0
      %v980 = vadd.f32 0.0, %v979
      %v981 = vpop.f32.mrb[0].mxu0
      %982 = vmatprep.mubr.f32.mxu0 0.0
      %983 = vmatmul.mubr.f32.gmra.mrb[0].mxu0 %v469
      %v984 = vpop.f32.mrb[0].mxu0
      %v985 = vadd.f32 0.0, %v984
      %v986 = vpop.f32.mrb[0].mxu0
      %987 = vmatprep.mubr.f32.mxu0 0.0
      %988 = vmatmul.mubr.f32.gmra.mrb[0].mxu0 %v472
      %v989 = vpop.f32.mrb[0].mxu0
      %v990 = vadd.f32 0.0, %v989
      %v991 = vpop.f32.mrb[0].mxu0
      %992 = vmatprep.mubr.f32.mxu0 0.0
      %993 = vmatmul.mubr.f32.gmra.mrb[0].mxu0 %v475
      %v994 = vpop.f32.mrb[0].mxu0
      %v995 = vadd.f32 0.0, %v994
      %v996 = vpop.f32.mrb[0].mxu0
      %997 = vmatprep.mubr.f32.mxu0 0.0
      %998 = vmatmul.mubr.f32.gmra.mrb[0].mxu0 %v478
      %v999 = vpop.f32.mrb[0].mxu0
      %v1000 = vadd.f32 0.0, %v999
      %v1001 = vpop.f32.mrb[0].mxu0
      %1002 = vmatprep.mubr.f32.mxu0 0.0
      %1003 = vmatmul.mubr.f32.gmra.mrb[0].mxu0 %v481
      %v1004 = vpop.f32.mrb[0].mxu0
      %v1005 = vadd.f32 0.0, %v1004
      %v1006 = vpop.f32.mrb[0].mxu0
      %1007 = vmatprep.mubr.f32.mxu0 0.0
      %1008 = vmatmul.mubr.f32.gmra.mrb[0].mxu0 %v484
      %v1009 = vpop.f32.mrb[0].mxu0
      %v1010 = vadd.f32 0.0, %v1009
      %v1011 = vpop.f32.mrb[0].mxu0
      %1012 = vmatprep.mubr.f32.mxu0 0.0
      %1013 = vmatmul.mubr.f32.gmra.mrb[0].mxu0 %v487
      %v1014 = vpop.f32.mrb[0].mxu0
      %v1015 = vadd.f32 0.0, %v1014
      %v1016 = vpop.f32.mrb[0].mxu0
      %1017 = vmatprep.mubr.f32.mxu0 0.0
      %1018 = vmatmul.mubr.f32.gmra.mrb[0].mxu0 %v490
      %v1019 = vpop.f32.mrb[0].mxu0
      %v1020 = vadd.f32 0.0, %v1019
      %v1021 = vpop.f32.mrb[0].mxu0
      %1022 = vmatprep.mubr.f32.mxu0 0.0
      %1023 = vmatmul.mubr.f32.gmra.mrb[0].mxu0 %v493
      %v1024 = vpop.f32.mrb[0].mxu0
      %v1025 = vadd.f32 0.0, %v1024
      %v1026 = vpop.f32.mrb[0].mxu0
      %1027 = vmatprep.mubr.f32.mxu0 0.0
      %1028 = vmatmul.mubr.f32.gmra.mrb[0].mxu0 %v496
      %v1029 = vpop.f32.mrb[0].mxu0
      %v1030 = vadd.f32 0.0, %v1029
      %v1031 = vpop.f32.mrb[0].mxu0
      %1032 = vmatprep.mubr.f32.mxu0 0.0
      %1033 = vmatmul.mubr.f32.gmra.mrb[0].mxu0 %v499
      %v1034 = vpop.f32.mrb[0].mxu0
      %v1035 = vadd.f32 0.0, %v1034
      %v1036 = vpop.f32.mrb[0].mxu0
      %1037 = vmatprep.mubr.f32.mxu0 0.0
      %1038 = vmatmul.mubr.f32.gmra.mrb[0].mxu0 %v502
      %v1039 = vpop.f32.mrb[0].mxu0
      %v1040 = vadd.f32 0.0, %v1039
      %v1041 = vpop.f32.mrb[0].mxu0
      %1042 = vmatprep.mubr.f32.mxu0 0.0
      %1043 = vmatmul.mubr.f32.gmra.mrb[0].mxu0 %v505
      %v1044 = vpop.f32.mrb[0].mxu0
      %v1045 = vadd.f32 0.0, %v1044
      %v1046 = vpop.f32.mrb[0].mxu0
      %1047 = vmatprep.mubr.f32.mxu0 0.0
      %1048 = vmatmul.mubr.f32.gmra.mrb[0].mxu0 %v508
      %v1049 = vpop.f32.mrb[0].mxu0
      %v1050 = vadd.f32 0.0, %v1049
      %v1051 = vpop.f32.mrb[0].mxu0
      %1052 = vmatprep.mubr.f32.mxu0 0.0
      %1053 = vmatmul.mubr.f32.gmra.mrb[0].mxu0 %v511
      %v1054 = vpop.f32.mrb[0].mxu0
      %v1055 = vadd.f32 0.0, %v1054
      %v1056 = vpop.f32.mrb[0].mxu0
      %1057 = vmatprep.mubr.f32.mxu0 0.0
      %1058 = vmatmul.mubr.f32.gmra.mrb[0].mxu0 %v514
      %v1059 = vpop.f32.mrb[0].mxu0
      %v1060 = vadd.f32 0.0, %v1059
      %v1061 = vpop.f32.mrb[0].mxu0
      %1062 = vmatprep.mubr.f32.mxu0 0.0
      %1063 = vmatmul.mubr.f32.gmra.mrb[0].mxu0 %v517
      %v1064 = vpop.f32.mrb[0].mxu0
      %v1065 = vadd.f32 0.0, %v1064
      %v1066 = vpop.f32.mrb[0].mxu0
      %1067 = vmatprep.mubr.f32.mxu0 0.0
      %1068 = vmatmul.mubr.f32.gmra.mrb[0].mxu0 %v520
      %v1069 = vpop.f32.mrb[0].mxu0
      %v1070 = vadd.f32 0.0, %v1069
      %v1071 = vpop.f32.mrb[0].mxu0
      %1072 = vmatprep.mubr.f32.mxu0 0.0
      %1073 = vmatmul.mubr.f32.gmra.mrb[0].mxu0 %v523
      %v1074 = vpop.f32.mrb[0].mxu0
      %v1075 = vadd.f32 0.0, %v1074
      %v1076 = vpop.f32.mrb[0].mxu0
      %1077 = vmatprep.mubr.f32.mxu0 0.0
      %1078 = vmatmul.mubr.f32.gmra.mrb[0].mxu0 %v526
      %v1079 = vpop.f32.mrb[0].mxu0
      %v1080 = vadd.f32 0.0, %v1079
      %v1081 = vpop.f32.mrb[0].mxu0
      %1082 = vmatprep.mubr.f32.mxu0 0.0
      %1083 = vmatmul.mubr.f32.gmra.mrb[0].mxu0 %v529
      %v1084 = vpop.f32.mrb[0].mxu0
      %v1085 = vadd.f32 0.0, %v1084
      %v1086 = vpop.f32.mrb[0].mxu0
      %1087 = vmatprep.mubr.f32.mxu0 0.0
      %1088 = vmatmul.mubr.f32.gmra.mrb[0].mxu0 %v532
      %v1089 = vpop.f32.mrb[0].mxu0
      %v1090 = vadd.f32 0.0, %v1089
      %v1091 = vpop.f32.mrb[0].mxu0
      %1092 = vmatprep.mubr.f32.mxu0 0.0
      %1093 = vmatmul.mubr.f32.gmra.mrb[0].mxu0 %v535
      %v1094 = vpop.f32.mrb[0].mxu0
      %v1095 = vadd.f32 0.0, %v1094
      %v1096 = vpop.f32.mrb[0].mxu0
      %1097 = vmatprep.mubr.f32.mxu0 0.0
      %1098 = vmatmul.mubr.f32.gmra.mrb[0].mxu0 %v538
      %v1099 = vpop.f32.mrb[0].mxu0
      %v1100 = vadd.f32 0.0, %v1099
      %v1101 = vpop.f32.mrb[0].mxu0
      %1102 = vmatprep.mubr.f32.mxu0 0.0
      %1103 = vmatmul.mubr.f32.gmra.mrb[0].mxu0 %v541
      %v1104 = vpop.f32.mrb[0].mxu0
      %v1105 = vadd.f32 0.0, %v1104
      %v1106 = vpop.f32.mrb[0].mxu0
      %1107 = vmatprep.mubr.f32.mxu0 0.0
      %1108 = vmatmul.mubr.f32.gmra.mrb[0].mxu0 %v544
      %v1109 = vpop.f32.mrb[0].mxu0
      %v1110 = vadd.f32 0.0, %v1109
      %v1111 = vpop.f32.mrb[0].mxu0
      %1112 = vmatprep.mubr.f32.mxu0 0.0
      %1113 = vmatmul.mubr.f32.gmra.mrb[0].mxu0 %v547
      %v1114 = vpop.f32.mrb[0].mxu0
      %v1115 = vadd.f32 0.0, %v1114
      %v1116 = vpop.f32.mrb[0].mxu0
      %1117 = vmatprep.mubr.f32.mxu0 0.0
      %1118 = vmatmul.mubr.f32.gmra.mrb[0].mxu0 %v550
      %v1119 = vpop.f32.mrb[0].mxu0
      %v1120 = vadd.f32 0.0, %v1119
      %v1121 = vpop.f32.mrb[0].mxu0
      %1122 = vmatprep.mubr.f32.mxu0 0.0
      %1123 = vmatmul.mubr.f32.gmra.mrb[0].mxu0 %v553
      %v1124 = vpop.f32.mrb[0].mxu0
      %v1125 = vadd.f32 0.0, %v1124
      %v1126 = vpop.f32.mrb[0].mxu0
      %1127 = vmatprep.mubr.f32.mxu0 0.0
      %1128 = vmatmul.mubr.f32.gmra.mrb[0].mxu0 %v556
      %v1129 = vpop.f32.mrb[0].mxu0
      %v1130 = vadd.f32 0.0, %v1129
      %v1131 = vpop.f32.mrb[0].mxu0
      %1132 = vmatprep.mubr.f32.mxu0 0.0
      %1133 = vmatmul.mubr.f32.gmra.mrb[0].mxu0 %v559
      %v1134 = vpop.f32.mrb[0].mxu0
      %v1135 = vadd.f32 0.0, %v1134
      %v1136 = vpop.f32.mrb[0].mxu0
      %1137 = vmatprep.mubr.f32.mxu0 0.0
      %1138 = vmatmul.mubr.f32.gmra.mrb[0].mxu0 %v562
      %v1139 = vpop.f32.mrb[0].mxu0
      %v1140 = vadd.f32 0.0, %v1139
      %v1141 = vpop.f32.mrb[0].mxu0
      %1142 = vmatprep.mubr.f32.mxu0 0.0
      %1143 = vmatmul.mubr.f32.gmra.mrb[0].mxu0 %v565
      %v1144 = vpop.f32.mrb[0].mxu0
      %v1145 = vadd.f32 0.0, %v1144
      %v1146 = vpop.f32.mrb[0].mxu0
      %1147 = vmatprep.mubr.f32.mxu0 0.0
      %1148 = vmatmul.mubr.f32.gmra.mrb[0].mxu0 %v568
      %v1149 = vpop.f32.mrb[0].mxu0
      %v1150 = vadd.f32 0.0, %v1149
      %v1151 = vpop.f32.mrb[0].mxu0
      %1152 = vmatprep.mubr.f32.mxu0 0.0
      %1153 = vmatmul.mubr.f32.gmra.mrb[0].mxu0 %v571
      %v1154 = vpop.f32.mrb[0].mxu0
      %v1155 = vadd.f32 0.0, %v1154
      %v1156 = vpop.f32.mrb[0].mxu0
      %1157 = vmatprep.mubr.f32.mxu0 0.0
      %1158 = vmatmul.mubr.f32.gmra.mrb[0].mxu0 %v574
      %v1159 = vpop.f32.mrb[0].mxu0
      %v1160 = vadd.f32 0.0, %v1159
      %v1161 = vpop.f32.mrb[0].mxu0
      %1162 = vmatprep.mubr.f32.mxu0 0.0
      %1163 = vmatmul.mubr.f32.gmra.mrb[0].mxu0 %v577
      %v1164 = vpop.f32.mrb[0].mxu0
      %v1165 = vadd.f32 0.0, %v1164
      %v1166 = vpop.f32.mrb[0].mxu0
      %1167 = vmatprep.mubr.f32.mxu0 0.0
      %1168 = vmatmul.mubr.f32.gmra.mrb[0].mxu0 %v580
      %v1169 = vpop.f32.mrb[0].mxu0
      %v1170 = vadd.f32 0.0, %v1169
      %v1171 = vpop.f32.mrb[0].mxu0
      %1172 = vmatprep.mubr.f32.mxu0 0.0
      %1173 = vmatmul.mubr.f32.gmra.mrb[0].mxu0 %v583
      %v1174 = vpop.f32.mrb[0].mxu0
      %v1175 = vadd.f32 0.0, %v1174
      %v1176 = vpop.f32.mrb[0].mxu0
      %1177 = vmatprep.mubr.f32.mxu0 0.0
      %1178 = vmatmul.mubr.f32.gmra.mrb[0].mxu0 %v586
      %v1179 = vpop.f32.mrb[0].mxu0
      %v1180 = vadd.f32 0.0, %v1179
      %v1181 = vpop.f32.mrb[0].mxu0
      %1182 = vmatprep.mubr.f32.mxu0 0.0
      %1183 = vmatmul.mubr.f32.gmra.mrb[0].mxu0 %v589
      %v1184 = vpop.f32.mrb[0].mxu0
      %v1185 = vadd.f32 0.0, %v1184
      %v1186 = vpop.f32.mrb[0].mxu0
      %1187 = vmatprep.mubr.f32.mxu0 0.0
      %1188 = vmatmul.mubr.f32.gmra.mrb[0].mxu0 %v592
      %v1189 = vpop.f32.mrb[0].mxu0
      %v1190 = vadd.f32 0.0, %v1189
      %v1191 = vpop.f32.mrb[0].mxu0
      %1192 = vmatprep.mubr.f32.mxu0 0.0
      %1193 = vmatmul.mubr.f32.gmra.mrb[0].mxu0 %v595
      %v1194 = vpop.f32.mrb[0].mxu0
      %v1195 = vadd.f32 0.0, %v1194
      %v1196 = vpop.f32.mrb[0].mxu0
      %1197 = vmatprep.mubr.f32.mxu0 0.0
      %1198 = vmatmul.mubr.f32.gmra.mrb[0].mxu0 %v598
      %v1199 = vpop.f32.mrb[0].mxu0
      %v1200 = vadd.f32 0.0, %v1199
      %v1201 = vpop.f32.mrb[0].mxu0
      %1202 = vmatprep.mubr.f32.mxu0 0.0
      %1203 = vmatmul.mubr.f32.gmra.mrb[0].mxu0 %v601
      %v1204 = vpop.f32.mrb[0].mxu0
      %v1205 = vadd.f32 0.0, %v1204
      %v1206 = vpop.f32.mrb[0].mxu0
      %1207 = vmatprep.mubr.f32.mxu0 0.0
      %1208 = vmatmul.mubr.f32.gmra.mrb[0].mxu0 %v604
      %v1209 = vpop.f32.mrb[0].mxu0
      %v1210 = vadd.f32 0.0, %v1209
      %v1211 = vpop.f32.mrb[0].mxu0
      %1212 = vmatprep.mubr.f32.mxu0 0.0
      %1213 = vmatmul.mubr.f32.gmra.mrb[0].mxu0 %v607
      %v1214 = vpop.f32.mrb[0].mxu0
      %v1215 = vadd.f32 0.0, %v1214
      %v1216 = vpop.f32.mrb[0].mxu0
      %1217 = vmatprep.mubr.f32.mxu0 0.0
      %1218 = vmatmul.mubr.f32.gmra.mrb[0].mxu0 %v610
      %v1219 = vpop.f32.mrb[0].mxu0
      %v1220 = vadd.f32 0.0, %v1219
      %v1221 = vpop.f32.mrb[0].mxu0
      %1222 = vmatprep.mubr.f32.mxu0 0.0
      %1223 = vmatmul.mubr.f32.gmra.mrb[0].mxu0 %v613
      %v1224 = vpop.f32.mrb[0].mxu0
      %v1225 = vadd.f32 0.0, %v1224
      %v1226 = vpop.f32.mrb[0].mxu0
      %1227 = vmatprep.mubr.f32.mxu0 0.0
      %1228 = vmatmul.mubr.f32.gmra.mrb[0].mxu0 %v616
      %v1229 = vpop.f32.mrb[0].mxu0
      %v1230 = vadd.f32 0.0, %v1229
      %v1231 = vpop.f32.mrb[0].mxu0
      %1232 = vmatprep.mubr.f32.mxu0 0.0
      %1233 = vmatmul.mubr.f32.gmra.mrb[0].mxu0 %v619
      %v1234 = vpop.f32.mrb[0].mxu0
      %v1235 = vadd.f32 0.0, %v1234
      %v1236 = vpop.f32.mrb[0].mxu0
      %1237 = vmatprep.mubr.f32.mxu0 0.0
      %1238 = vmatmul.mubr.f32.gmra.mrb[0].mxu0 %v622
      %v1239 = vpop.f32.mrb[0].mxu0
      %v1240 = vadd.f32 0.0, %v1239
      %v1241 = vpop.f32.mrb[0].mxu0
      %1242 = vmatprep.mubr.f32.mxu0 0.0
      %1243 = vmatmul.mubr.f32.gmra.mrb[0].mxu0 %v625
      %v1244 = vpop.f32.mrb[0].mxu0
      %v1245 = vadd.f32 0.0, %v1244
      %v1246 = vpop.f32.mrb[0].mxu0
      %1247 = vmatprep.mubr.f32.mxu0 0.0
      %1248 = vmatmul.mubr.f32.gmra.mrb[0].mxu0 %v628
      %v1249 = vpop.f32.mrb[0].mxu0
      %v1250 = vadd.f32 0.0, %v1249
      %v1251 = vpop.f32.mrb[0].mxu0
      %1252 = vmatprep.mubr.f32.mxu0 0.0
      %1253 = vmatmul.mubr.f32.gmra.mrb[0].mxu0 %v631
      %v1254 = vpop.f32.mrb[0].mxu0
      %v1255 = vadd.f32 0.0, %v1254
      %v1256 = vpop.f32.mrb[0].mxu0
      %1257 = vmatprep.mubr.f32.mxu0 0.0
      %1258 = vmatmul.mubr.f32.gmra.mrb[0].mxu0 %v634
      %v1259 = vpop.f32.mrb[0].mxu0
      %v1260 = vadd.f32 0.0, %v1259
      %v1261 = vpop.f32.mrb[0].mxu0
      %1262 = vmatprep.mubr.f32.mxu0 0.0
      %1263 = vmatmul.mubr.f32.gmra.mrb[0].mxu0 %v637
      %v1264 = vpop.f32.mrb[0].mxu0
      %v1265 = vadd.f32 0.0, %v1264
      %v1266 = vpop.f32.mrb[0].mxu0
      %1267 = vmatprep.mubr.f32.mxu0 0.0
      %1268 = vmatmul.mubr.f32.gmra.mrb[0].mxu0 %v640
      %v1269 = vpop.f32.mrb[0].mxu0
      %v1270 = vadd.f32 0.0, %v1269
      %v1271 = vpop.f32.mrb[0].mxu0
      %1272 = vmatprep.mubr.f32.mxu0 0.0
      %1273 = vmatmul.mubr.f32.gmra.mrb[0].mxu0 %v643
      %v1274 = vpop.f32.mrb[0].mxu0
      %v1275 = vadd.f32 0.0, %v1274
      %v1276 = vpop.f32.mrb[0].mxu0
      %1277 = vmatprep.mubr.f32.mxu0 0.0
      %1278 = vmatmul.mubr.f32.gmra.mrb[0].mxu0 %v646
      %v1279 = vpop.f32.mrb[0].mxu0
      %v1280 = vadd.f32 0.0, %v1279
      %v1281 = vpop.f32.mrb[0].mxu0
      %1282 = vmatprep.mubr.f32.mxu0 0.0
      %1283 = vmatmul.mubr.f32.gmra.mrb[0].mxu0 %v649
      %v1284 = vpop.f32.mrb[0].mxu0
      %v1285 = vadd.f32 0.0, %v1284
      %v1286 = vpop.f32.mrb[0].mxu0
      %1287 = vmatprep.mubr.f32.mxu0 0.0
      %1288 = vmatmul.mubr.f32.gmra.mrb[0].mxu0 %v652
      %v1289 = vpop.f32.mrb[0].mxu0
      %v1290 = vadd.f32 0.0, %v1289
      %v1291 = vpop.f32.mrb[0].mxu0
      %1292 = vmatprep.mubr.f32.mxu0 0.0
      %1293 = vmatmul.mubr.f32.gmra.mrb[0].mxu0 %v655
      %v1294 = vpop.f32.mrb[0].mxu0
      %v1295 = vadd.f32 0.0, %v1294
      %v1296 = vpop.f32.mrb[0].mxu0
      %1297 = vmatprep.mubr.f32.mxu0 0.0
      %1298 = vmatmul.mubr.f32.gmra.mrb[0].mxu0 %v658
      %v1299 = vpop.f32.mrb[0].mxu0
      %v1300 = vadd.f32 0.0, %v1299
      %v1301 = vpop.f32.mrb[0].mxu0
      %1302 = vmatprep.mubr.f32.mxu0 0.0
      %1303 = vmatmul.mubr.f32.gmra.mrb[0].mxu0 %v661
      %v1304 = vpop.f32.mrb[0].mxu0
      %v1305 = vadd.f32 0.0, %v1304
      %v1306 = vpop.f32.mrb[0].mxu0
      %1307 = vmatprep.mubr.f32.mxu0 0.0
      %1308 = vmatmul.mubr.f32.gmra.mrb[0].mxu0 %v664
      %v1309 = vpop.f32.mrb[0].mxu0
      %v1310 = vadd.f32 0.0, %v1309
      %v1311 = vpop.f32.mrb[0].mxu0
      %1312 = vmatprep.mubr.f32.mxu0 0.0
      %1313 = vmatmul.mubr.f32.gmra.mrb[0].mxu0 %v667
      %v1314 = vpop.f32.mrb[0].mxu0
      %v1315 = vadd.f32 0.0, %v1314
      %v1316 = vpop.f32.mrb[0].mxu0
      %1317 = vmatprep.mubr.f32.mxu0 0.0
      %1318 = vmatmul.mubr.f32.gmra.mrb[0].mxu0 %v670
      %v1319 = vpop.f32.mrb[0].mxu0
      %v1320 = vadd.f32 0.0, %v1319
      %v1321 = vpop.f32.mrb[0].mxu0
      %1322 = vmatprep.mubr.f32.mxu0 0.0
      %1323 = vmatmul.mubr.f32.gmra.mrb[0].mxu0 %v673
      %v1324 = vpop.f32.mrb[0].mxu0
      %v1325 = vadd.f32 0.0, %v1324
      %v1326 = vpop.f32.mrb[0].mxu0
      %1327 = vmatprep.mubr.f32.mxu0 0.0
      %1328 = vmatmul.mubr.f32.gmra.mrb[0].mxu0 %v676
      %v1329 = vpop.f32.mrb[0].mxu0
      %v1330 = vadd.f32 0.0, %v1329
      %v1331 = vpop.f32.mrb[0].mxu0
      %1332 = vmatprep.mubr.f32.mxu0 0.0
      %1333 = vmatmul.mubr.f32.gmra.mrb[0].mxu0 %v679
      %v1334 = vpop.f32.mrb[0].mxu0
      %v1335 = vadd.f32 0.0, %v1334
      %v1336 = vpop.f32.mrb[0].mxu0
      %1337 = vmatprep.mubr.f32.mxu0 0.0
      %1338 = vmatmul.mubr.f32.gmra.mrb[0].mxu0 %v682
      %v1339 = vpop.f32.mrb[0].mxu0
      %v1340 = vadd.f32 0.0, %v1339
      %v1341 = vpop.f32.mrb[0].mxu0
      %1342 = vmatprep.mubr.f32.mxu0 0.0
      %1343 = vmatmul.mubr.f32.gmra.mrb[0].mxu0 %v685
      %v1344 = vpop.f32.mrb[0].mxu0
      %v1345 = vadd.f32 0.0, %v1344
      %v1346 = vpop.f32.mrb[0].mxu0
      %1347 = vmatprep.mubr.f32.mxu0 0.0
      %1348 = vmatmul.mubr.f32.gmra.mrb[0].mxu0 %v688
      %v1349 = vpop.f32.mrb[0].mxu0
      %v1350 = vadd.f32 0.0, %v1349
      %v1351 = vpop.f32.mrb[0].mxu0
      %1352 = vmatprep.mubr.f32.mxu0 0.0
      %1353 = vmatmul.mubr.f32.gmra.mrb[0].mxu0 %v691
      %v1354 = vpop.f32.mrb[0].mxu0
      %v1355 = vadd.f32 0.0, %v1354
      %v1356 = vpop.f32.mrb[0].mxu0
      %1357 = vmatprep.mubr.f32.mxu0 0.0
      %1358 = vmatmul.mubr.f32.gmra.mrb[0].mxu0 %v694
      %v1359 = vpop.f32.mrb[0].mxu0
      %v1360 = vadd.f32 0.0, %v1359
      %v1361 = vpop.f32.mrb[0].mxu0
      %1362 = vmatprep.mubr.f32.mxu0 0.0
      %1363 = vmatmul.mubr.f32.gmra.mrb[0].mxu0 %v697
      %v1364 = vpop.f32.mrb[0].mxu0
      %v1365 = vadd.f32 0.0, %v1364
      %v1366 = vpop.f32.mrb[0].mxu0
      %1367 = vmatprep.mubr.f32.mxu0 0.0
      %1368 = vmatmul.mubr.f32.gmra.mrb[0].mxu0 %v700
      %v1369 = vpop.f32.mrb[0].mxu0
      %v1370 = vadd.f32 0.0, %v1369
      %v1371 = vpop.f32.mrb[0].mxu0
      %1372 = vmatprep.mubr.f32.mxu0 0.0
      %1373 = vmatmul.mubr.f32.gmra.mrb[0].mxu0 %v703
      %v1374 = vpop.f32.mrb[0].mxu0
      %v1375 = vadd.f32 0.0, %v1374
      %v1376 = vpop.f32.mrb[0].mxu0
      %1377 = vmatprep.mubr.f32.mxu0 0.0
      %1378 = vmatmul.mubr.f32.gmra.mrb[0].mxu0 %v706
      %v1379 = vpop.f32.mrb[0].mxu0
      %v1380 = vadd.f32 0.0, %v1379
      %v1381 = vpop.f32.mrb[0].mxu0
      %1382 = vmatprep.mubr.f32.mxu0 0.0
      %1383 = vmatmul.mubr.f32.gmra.mrb[0].mxu0 %v709
      %v1384 = vpop.f32.mrb[0].mxu0
      %v1385 = vadd.f32 0.0, %v1384
      %v1386 = vpop.f32.mrb[0].mxu0
      %1387 = vmatprep.mubr.f32.mxu0 0.0
      %1388 = vmatmul.mubr.f32.gmra.mrb[0].mxu0 %v712
      %v1389 = vpop.f32.mrb[0].mxu0
      %v1390 = vadd.f32 0.0, %v1389
      %v1391 = vpop.f32.mrb[0].mxu0
      %1392 = vmatprep.mubr.f32.mxu0 0.0
      %1393 = vmatmul.mubr.f32.gmra.mrb[0].mxu0 %v715
      %v1394 = vpop.f32.mrb[0].mxu0
      %v1395 = vadd.f32 0.0, %v1394
      %v1396 = vpop.f32.mrb[0].mxu0
      %1397 = vmatprep.mubr.f32.mxu0 0.0
      %1398 = vmatmul.mubr.f32.gmra.mrb[0].mxu0 %v718
      %v1399 = vpop.f32.mrb[0].mxu0
      %v1400 = vadd.f32 0.0, %v1399
      %v1401 = vpop.f32.mrb[0].mxu0
      %1402 = vmatprep.mubr.f32.mxu0 0.0
      %1403 = vmatmul.mubr.f32.gmra.mrb[0].mxu0 %v721
      %v1404 = vpop.f32.mrb[0].mxu0
      %v1405 = vadd.f32 0.0, %v1404
      %v1406 = vpop.f32.mrb[0].mxu0
      %1407 = vmatprep.mubr.f32.mxu0 0.0
      %1408 = vmatmul.mubr.f32.gmra.mrb[0].mxu0 %v724
      %v1409 = vpop.f32.mrb[0].mxu0
      %v1410 = vadd.f32 0.0, %v1409
      %v1411 = vpop.f32.mrb[0].mxu0
      %1412 = vmatprep.mubr.f32.mxu0 0.0
      %1413 = vmatmul.mubr.f32.gmra.mrb[0].mxu0 %v727
      %v1414 = vpop.f32.mrb[0].mxu0
      %v1415 = vadd.f32 0.0, %v1414
      %v1416 = vpop.f32.mrb[0].mxu0
      %1417 = vmatprep.mubr.f32.mxu0 0.0
      %1418 = vmatmul.mubr.f32.gmra.mrb[0].mxu0 %v730
      %v1419 = vpop.f32.mrb[0].mxu0
      %v1420 = vadd.f32 0.0, %v1419
      %v1421 = vpop.f32.mrb[0].mxu0
      %1422 = vmatprep.mubr.f32.mxu0 0.0
      %1423 = vmatmul.mubr.f32.gmra.mrb[0].mxu0 %v733
      %v1424 = vpop.f32.mrb[0].mxu0
      %v1425 = vadd.f32 0.0, %v1424
      %v1426 = vpop.f32.mrb[0].mxu0
      %1427 = vmatprep.mubr.f32.mxu0 0.0
      %1428 = vmatmul.mubr.f32.gmra.mrb[0].mxu0 %v736
      %v1429 = vpop.f32.mrb[0].mxu0
      %v1430 = vadd.f32 0.0, %v1429
      %v1431 = vpop.f32.mrb[0].mxu0
      %1432 = vmatprep.mubr.f32.mxu0 0.0
      %1433 = vmatmul.mubr.f32.gmra.mrb[0].mxu0 %v739
      %v1434 = vpop.f32.mrb[0].mxu0
      %v1435 = vadd.f32 0.0, %v1434
      %v1436 = vpop.f32.mrb[0].mxu0
      %1437 = vmatprep.mubr.f32.mxu0 0.0
      %1438 = vmatmul.mubr.f32.gmra.mrb[0].mxu0 %v742
      %v1439 = vpop.f32.mrb[0].mxu0
      %v1440 = vadd.f32 0.0, %v1439
      %v1441 = vpop.f32.mrb[0].mxu0
      %1442 = vmatprep.mubr.f32.mxu0 0.0
      %1443 = vmatmul.mubr.f32.gmra.mrb[0].mxu0 %v745
      %v1444 = vpop.f32.mrb[0].mxu0
      %v1445 = vadd.f32 0.0, %v1444
      %v1446 = vpop.f32.mrb[0].mxu0
      %1447 = vmatprep.mubr.f32.mxu0 0.0
      %1448 = vmatmul.mubr.f32.gmra.mrb[0].mxu0 %v748
      %v1449 = vpop.f32.mrb[0].mxu0
      %v1450 = vadd.f32 0.0, %v1449
      %v1451 = vpop.f32.mrb[0].mxu0
      %1452 = vmatprep.mubr.f32.mxu0 0.0
      %1453 = vmatmul.mubr.f32.gmra.mrb[0].mxu0 %v751
      %v1454 = vpop.f32.mrb[0].mxu0
      %v1455 = vadd.f32 0.0, %v1454
      %v1456 = vpop.f32.mrb[0].mxu0
      %1457 = vdwg.mxu0
      %1458 = vmatprep.subr.mxu0 0.0
      %1459 = vmatpush1.msra.mxu0 %v820
      %1460 = vmatprep.subr.mxu0 0.0
      %1461 = vmatpush1.msra.mxu0 %v825
      %1462 = vmatprep.subr.mxu0 0.0
      %1463 = vmatpush1.msra.mxu0 %v830
      %1464 = vmatprep.subr.mxu0 0.0
      %1465 = vmatpush1.msra.mxu0 %v835
      %1466 = vmatprep.subr.mxu0 0.0
      %1467 = vmatpush1.msra.mxu0 %v840
      %1468 = vmatprep.subr.mxu0 0.0
      %1469 = vmatpush1.msra.mxu0 %v845
      %1470 = vmatprep.subr.mxu0 0.0
      %1471 = vmatpush1.msra.mxu0 %v850
      %1472 = vmatprep.subr.mxu0 0.0
      %1473 = vmatpush1.msra.mxu0 %v855
      %1474 = vmatprep.subr.mxu0 0.0
      %1475 = vmatpush1.msra.mxu0 %v860
      %1476 = vmatprep.subr.mxu0 0.0
      %1477 = vmatpush1.msra.mxu0 %v865
      %1478 = vmatprep.subr.mxu0 0.0
      %1479 = vmatpush1.msra.mxu0 %v870
      %1480 = vmatprep.subr.mxu0 0.0
      %1481 = vmatpush1.msra.mxu0 %v875
      %1482 = vmatprep.subr.mxu0 0.0
      %1483 = vmatpush1.msra.mxu0 %v880
      %1484 = vmatprep.subr.mxu0 0.0
      %1485 = vmatpush1.msra.mxu0 %v885
      %1486 = vmatprep.subr.mxu0 0.0
      %1487 = vmatpush1.msra.mxu0 %v890
      %1488 = vmatprep.subr.mxu0 0.0
      %1489 = vmatpush1.msra.mxu0 %v895
      %1490 = vmatprep.subr.mxu0 0.0
      %1491 = vmatpush1.msra.mxu0 %v900
      %1492 = vmatprep.subr.mxu0 0.0
      %1493 = vmatpush1.msra.mxu0 %v905
      %1494 = vmatprep.subr.mxu0 0.0
      %1495 = vmatpush1.msra.mxu0 %v910
      %1496 = vmatprep.subr.mxu0 0.0
      %1497 = vmatpush1.msra.mxu0 %v915
      %1498 = vmatprep.subr.mxu0 0.0
      %1499 = vmatpush1.msra.mxu0 %v920
      %1500 = vmatprep.subr.mxu0 0.0
      %1501 = vmatpush1.msra.mxu0 %v925
      %1502 = vmatprep.subr.mxu0 0.0
      %1503 = vmatpush1.msra.mxu0 %v930
      %1504 = vmatprep.subr.mxu0 0.0
      %1505 = vmatpush1.msra.mxu0 %v935
      %1506 = vmatprep.subr.mxu0 0.0
      %1507 = vmatpush1.msra.mxu0 %v940
      %1508 = vmatprep.subr.mxu0 0.0
      %1509 = vmatpush1.msra.mxu0 %v945
      %1510 = vmatprep.subr.mxu0 0.0
      %1511 = vmatpush1.msra.mxu0 %v950
      %1512 = vmatprep.subr.mxu0 0.0
      %1513 = vmatpush1.msra.mxu0 %v955
      %1514 = vmatprep.subr.mxu0 0.0
      %1515 = vmatpush1.msra.mxu0 %v960
      %1516 = vmatprep.subr.mxu0 0.0
      %1517 = vmatpush1.msra.mxu0 %v965
      %1518 = vmatprep.subr.mxu0 0.0
      %1519 = vmatpush1.msra.mxu0 %v970
      %1520 = vmatprep.subr.mxu0 0.0
      %1521 = vmatpush1.msra.mxu0 %v975
      %1522 = vmatprep.mubr.f32.mxu0 %v177
      %1523 = vmatmul.mubr.f32.gmra.mrb[0].mxu0 %v176
      %v1524 = vpop.f32.mrb[0].mxu0
      %v1525 = vadd.f32 0.0, %v1524
      %v1526 = vpop.f32.mrb[0].mxu0
      %1527 = vmatprep.mubr.f32.mxu0 %v179
      %1528 = vmatmul.mubr.f32.gmra.mrb[0].mxu0 %v178
      %v1529 = vpop.f32.mrb[0].mxu0
      %v1530 = vadd.f32 0.0, %v1529
      %v1531 = vpop.f32.mrb[0].mxu0
      %1532 = vmatprep.mubr.f32.mxu0 %v181
      %1533 = vmatmul.mubr.f32.gmra.mrb[0].mxu0 %v180
      %v1534 = vpop.f32.mrb[0].mxu0
      %v1535 = vadd.f32 0.0, %v1534
      %v1536 = vpop.f32.mrb[0].mxu0
      %1537 = vmatprep.mubr.f32.mxu0 %v183
      %1538 = vmatmul.mubr.f32.gmra.mrb[0].mxu0 %v182
      %v1539 = vpop.f32.mrb[0].mxu0
      %v1540 = vadd.f32 0.0, %v1539
      %v1541 = vpop.f32.mrb[0].mxu0
      %1542 = vmatprep.mubr.f32.mxu0 %v185
      %1543 = vmatmul.mubr.f32.gmra.mrb[0].mxu0 %v184
      %v1544 = vpop.f32.mrb[0].mxu0
      %v1545 = vadd.f32 0.0, %v1544
      %v1546 = vpop.f32.mrb[0].mxu0
      %1547 = vmatprep.mubr.f32.mxu0 %v187
      %1548 = vmatmul.mubr.f32.gmra.mrb[0].mxu0 %v186
      %v1549 = vpop.f32.mrb[0].mxu0
      %v1550 = vadd.f32 0.0, %v1549
      %v1551 = vpop.f32.mrb[0].mxu0
      %1552 = vmatprep.mubr.f32.mxu0 %v189
      %1553 = vmatmul.mubr.f32.gmra.mrb[0].mxu0 %v188
      %v1554 = vpop.f32.mrb[0].mxu0
      %v1555 = vadd.f32 0.0, %v1554
      %v1556 = vpop.f32.mrb[0].mxu0
      %1557 = vmatprep.mubr.f32.mxu0 %v191
      %1558 = vmatmul.mubr.f32.gmra.mrb[0].mxu0 %v190
      %v1559 = vpop.f32.mrb[0].mxu0
      %v1560 = vadd.f32 0.0, %v1559
      %v1561 = vpop.f32.mrb[0].mxu0
      %1562 = vmatprep.mubr.f32.mxu0 %v193
      %1563 = vmatmul.mubr.f32.gmra.mrb[0].mxu0 %v192
      %v1564 = vpop.f32.mrb[0].mxu0
      %v1565 = vadd.f32 0.0, %v1564
      %v1566 = vpop.f32.mrb[0].mxu0
      %1567 = vmatprep.mubr.f32.mxu0 %v195
      %1568 = vmatmul.mubr.f32.gmra.mrb[0].mxu0 %v194
      %v1569 = vpop.f32.mrb[0].mxu0
      %v1570 = vadd.f32 0.0, %v1569
      %v1571 = vpop.f32.mrb[0].mxu0
      %1572 = vmatprep.mubr.f32.mxu0 %v197
      %1573 = vmatmul.mubr.f32.gmra.mrb[0].mxu0 %v196
      %v1574 = vpop.f32.mrb[0].mxu0
      %v1575 = vadd.f32 0.0, %v1574
      %v1576 = vpop.f32.mrb[0].mxu0
      %1577 = vmatprep.mubr.f32.mxu0 %v199
      %1578 = vmatmul.mubr.f32.gmra.mrb[0].mxu0 %v198
      %v1579 = vpop.f32.mrb[0].mxu0
      %v1580 = vadd.f32 0.0, %v1579
      %v1581 = vpop.f32.mrb[0].mxu0
      %1582 = vmatprep.mubr.f32.mxu0 %v201
      %1583 = vmatmul.mubr.f32.gmra.mrb[0].mxu0 %v200
      %v1584 = vpop.f32.mrb[0].mxu0
      %v1585 = vadd.f32 0.0, %v1584
      %v1586 = vpop.f32.mrb[0].mxu0
      %1587 = vmatprep.mubr.f32.mxu0 %v203
      %1588 = vmatmul.mubr.f32.gmra.mrb[0].mxu0 %v202
      %v1589 = vpop.f32.mrb[0].mxu0
      %v1590 = vadd.f32 0.0, %v1589
      %v1591 = vpop.f32.mrb[0].mxu0
      %1592 = vmatprep.mubr.f32.mxu0 %v205
      %1593 = vmatmul.mubr.f32.gmra.mrb[0].mxu0 %v204
      %v1594 = vpop.f32.mrb[0].mxu0
      %v1595 = vadd.f32 0.0, %v1594
      %v1596 = vpop.f32.mrb[0].mxu0
      %1597 = vmatprep.mubr.f32.mxu0 %v207
      %1598 = vmatmul.mubr.f32.gmra.mrb[0].mxu0 %v206
      %v1599 = vpop.f32.mrb[0].mxu0
      %v1600 = vadd.f32 0.0, %v1599
      %v1601 = vpop.f32.mrb[0].mxu0
      %1602 = vmatprep.mubr.f32.mxu0 %v209
      %1603 = vmatmul.mubr.f32.gmra.mrb[0].mxu0 %v208
      %v1604 = vpop.f32.mrb[0].mxu0
      %v1605 = vadd.f32 0.0, %v1604
      %v1606 = vpop.f32.mrb[0].mxu0
      %1607 = vmatprep.mubr.f32.mxu0 %v211
      %1608 = vmatmul.mubr.f32.gmra.mrb[0].mxu0 %v210
      %v1609 = vpop.f32.mrb[0].mxu0
      %v1610 = vadd.f32 0.0, %v1609
      %v1611 = vpop.f32.mrb[0].mxu0
      %1612 = vmatprep.mubr.f32.mxu0 %v213
      %1613 = vmatmul.mubr.f32.gmra.mrb[0].mxu0 %v212
      %v1614 = vpop.f32.mrb[0].mxu0
      %v1615 = vadd.f32 0.0, %v1614
      %v1616 = vpop.f32.mrb[0].mxu0
      %1617 = vmatprep.mubr.f32.mxu0 %v215
      %1618 = vmatmul.mubr.f32.gmra.mrb[0].mxu0 %v214
      %v1619 = vpop.f32.mrb[0].mxu0
      %v1620 = vadd.f32 0.0, %v1619
      %v1621 = vpop.f32.mrb[0].mxu0
      %1622 = vmatprep.mubr.f32.mxu0 %v217
      %1623 = vmatmul.mubr.f32.gmra.mrb[0].mxu0 %v216
      %v1624 = vpop.f32.mrb[0].mxu0
      %v1625 = vadd.f32 0.0, %v1624
      %v1626 = vpop.f32.mrb[0].mxu0
      %1627 = vmatprep.mubr.f32.mxu0 %v219
      %1628 = vmatmul.mubr.f32.gmra.mrb[0].mxu0 %v218
      %v1629 = vpop.f32.mrb[0].mxu0
      %v1630 = vadd.f32 0.0, %v1629
      %v1631 = vpop.f32.mrb[0].mxu0
      %1632 = vmatprep.mubr.f32.mxu0 %v221
      %1633 = vmatmul.mubr.f32.gmra.mrb[0].mxu0 %v220
      %v1634 = vpop.f32.mrb[0].mxu0
      %v1635 = vadd.f32 0.0, %v1634
      %v1636 = vpop.f32.mrb[0].mxu0
      %1637 = vmatprep.mubr.f32.mxu0 %v223
      %1638 = vmatmul.mubr.f32.gmra.mrb[0].mxu0 %v222
      %v1639 = vpop.f32.mrb[0].mxu0
      %v1640 = vadd.f32 0.0, %v1639
      %v1641 = vpop.f32.mrb[0].mxu0
      %1642 = vmatprep.mubr.f32.mxu0 %v225
      %1643 = vmatmul.mubr.f32.gmra.mrb[0].mxu0 %v224
      %v1644 = vpop.f32.mrb[0].mxu0
      %v1645 = vadd.f32 0.0, %v1644
      %v1646 = vpop.f32.mrb[0].mxu0
      %1647 = vmatprep.mubr.f32.mxu0 %v227
      %1648 = vmatmul.mubr.f32.gmra.mrb[0].mxu0 %v226
      %v1649 = vpop.f32.mrb[0].mxu0
      %v1650 = vadd.f32 0.0, %v1649
      %v1651 = vpop.f32.mrb[0].mxu0
      %1652 = vmatprep.mubr.f32.mxu0 %v229
      %1653 = vmatmul.mubr.f32.gmra.mrb[0].mxu0 %v228
      %v1654 = vpop.f32.mrb[0].mxu0
      %v1655 = vadd.f32 0.0, %v1654
      %v1656 = vpop.f32.mrb[0].mxu0
      %1657 = vmatprep.mubr.f32.mxu0 %v231
      %1658 = vmatmul.mubr.f32.gmra.mrb[0].mxu0 %v230
      %v1659 = vpop.f32.mrb[0].mxu0
      %v1660 = vadd.f32 0.0, %v1659
      %v1661 = vpop.f32.mrb[0].mxu0
      %1662 = vmatprep.mubr.f32.mxu0 %v233
      %1663 = vmatmul.mubr.f32.gmra.mrb[0].mxu0 %v232
      %v1664 = vpop.f32.mrb[0].mxu0
      %v1665 = vadd.f32 0.0, %v1664
      %v1666 = vpop.f32.mrb[0].mxu0
      %1667 = vmatprep.mubr.f32.mxu0 %v235
      %1668 = vmatmul.mubr.f32.gmra.mrb[0].mxu0 %v234
      %v1669 = vpop.f32.mrb[0].mxu0
      %v1670 = vadd.f32 0.0, %v1669
      %v1671 = vpop.f32.mrb[0].mxu0
      %1672 = vmatprep.mubr.f32.mxu0 %v237
      %1673 = vmatmul.mubr.f32.gmra.mrb[0].mxu0 %v236
      %v1674 = vpop.f32.mrb[0].mxu0
      %v1675 = vadd.f32 0.0, %v1674
      %v1676 = vpop.f32.mrb[0].mxu0
      %1677 = vmatprep.mubr.f32.mxu0 %v239
      %1678 = vmatmul.mubr.f32.gmra.mrb[0].mxu0 %v238
      %v1679 = vpop.f32.mrb[0].mxu0
      %v1680 = vadd.f32 0.0, %v1679
      %v1681 = vpop.f32.mrb[0].mxu0
      %1682 = vdwg.mxu0
      %1683 = vst.msk [vmem:[%s172] sm:$0xff] %vm368, %v1525
      %1684 = vst.msk [vmem:[%s172 + $0x8] sm:$0xff] %vm368, %v1530
      %1685 = vst.msk [vmem:[%s172 + $0x10] sm:$0xff] %vm368, %v1535
      %1686 = vst.msk [vmem:[%s172 + $0x18] sm:$0xff] %vm368, %v1540
      %1687 = vst.msk [vmem:[%s172 + $0x20] sm:$0xff] %vm368, %v1545
      %1688 = vst.msk [vmem:[%s172 + $0x28] sm:$0xff] %vm368, %v1550
      %1689 = vst.msk [vmem:[%s172 + $0x30] sm:$0xff] %vm368, %v1555
      %1690 = vst.msk [vmem:[%s172 + $0x38] sm:$0xff] %vm368, %v1560
      %1691 = vst.msk [vmem:[%s172 + $0x40] sm:$0xff] %vm368, %v1565
      %1692 = vst.msk [vmem:[%s172 + $0x48] sm:$0xff] %vm368, %v1570
      %1693 = vst.msk [vmem:[%s172 + $0x50] sm:$0xff] %vm368, %v1575
      %1694 = vst.msk [vmem:[%s172 + $0x58] sm:$0xff] %vm368, %v1580
      %1695 = vst.msk [vmem:[%s172 + $0x60] sm:$0xff] %vm368, %v1585
      %1696 = vst.msk [vmem:[%s172 + $0x68] sm:$0xff] %vm368, %v1590
      %1697 = vst.msk [vmem:[%s172 + $0x70] sm:$0xff] %vm368, %v1595
      %1698 = vst.msk [vmem:[%s172 + $0x78] sm:$0xff] %vm368, %v1600
      %1699 = vst.msk [vmem:[%s172 + $0x80] sm:$0xff] %vm368, %v1605
      %1700 = vst.msk [vmem:[%s172 + $0x88] sm:$0xff] %vm368, %v1610
      %1701 = vst.msk [vmem:[%s172 + $0x90] sm:$0xff] %vm368, %v1615
      %1702 = vst.msk [vmem:[%s172 + $0x98] sm:$0xff] %vm368, %v1620
      %1703 = vst.msk [vmem:[%s172 + $0xa0] sm:$0xff] %vm368, %v1625
      %1704 = vst.msk [vmem:[%s172 + $0xa8] sm:$0xff] %vm368, %v1630
      %1705 = vst.msk [vmem:[%s172 + $0xb0] sm:$0xff] %vm368, %v1635
      %1706 = vst.msk [vmem:[%s172 + $0xb8] sm:$0xff] %vm368, %v1640
      %1707 = vst.msk [vmem:[%s172 + $0xc0] sm:$0xff] %vm368, %v1645
      %1708 = vst.msk [vmem:[%s172 + $0xc8] sm:$0xff] %vm368, %v1650
      %1709 = vst.msk [vmem:[%s172 + $0xd0] sm:$0xff] %vm368, %v1655
      %1710 = vst.msk [vmem:[%s172 + $0xd8] sm:$0xff] %vm368, %v1660
      %1711 = vst.msk [vmem:[%s172 + $0xe0] sm:$0xff] %vm368, %v1665
      %1712 = vst.msk [vmem:[%s172 + $0xe8] sm:$0xff] %vm368, %v1670
      %1713 = vst.msk [vmem:[%s172 + $0xf0] sm:$0xff] %vm368, %v1675
      %1714 = vst.msk [vmem:[%s172 + $0xf8] sm:$0xff] %vm368, %v1680
      %1715 = vmatprep.subr.mxu0 0.0
      %1716 = vmatpush1.msra.mxu0 %v980
      %1717 = vmatprep.subr.mxu0 0.0
      %1718 = vmatpush1.msra.mxu0 %v985
      %1719 = vmatprep.subr.mxu0 0.0
      %1720 = vmatpush1.msra.mxu0 %v990
      %1721 = vmatprep.subr.mxu0 0.0
      %1722 = vmatpush1.msra.mxu0 %v995
      %1723 = vmatprep.subr.mxu0 0.0
      %1724 = vmatpush1.msra.mxu0 %v1000
      %1725 = vmatprep.subr.mxu0 0.0
      %1726 = vmatpush1.msra.mxu0 %v1005
      %1727 = vmatprep.subr.mxu0 0.0
      %1728 = vmatpush1.msra.mxu0 %v1010
      %1729 = vmatprep.subr.mxu0 0.0
      %1730 = vmatpush1.msra.mxu0 %v1015
      %1731 = vmatprep.subr.mxu0 0.0
      %1732 = vmatpush1.msra.mxu0 %v1020
      %1733 = vmatprep.subr.mxu0 0.0
      %1734 = vmatpush1.msra.mxu0 %v1025
      %1735 = vmatprep.subr.mxu0 0.0
      %1736 = vmatpush1.msra.mxu0 %v1030
      %1737 = vmatprep.subr.mxu0 0.0
      %1738 = vmatpush1.msra.mxu0 %v1035
      %1739 = vmatprep.subr.mxu0 0.0
      %1740 = vmatpush1.msra.mxu0 %v1040
      %1741 = vmatprep.subr.mxu0 0.0
      %1742 = vmatpush1.msra.mxu0 %v1045
      %1743 = vmatprep.subr.mxu0 0.0
      %1744 = vmatpush1.msra.mxu0 %v1050
      %1745 = vmatprep.subr.mxu0 0.0
      %1746 = vmatpush1.msra.mxu0 %v1055
      %1747 = vmatprep.subr.mxu0 0.0
      %1748 = vmatpush1.msra.mxu0 %v1060
      %1749 = vmatprep.subr.mxu0 0.0
      %1750 = vmatpush1.msra.mxu0 %v1065
      %1751 = vmatprep.subr.mxu0 0.0
      %1752 = vmatpush1.msra.mxu0 %v1070
      %1753 = vmatprep.subr.mxu0 0.0
      %1754 = vmatpush1.msra.mxu0 %v1075
      %1755 = vmatprep.subr.mxu0 0.0
      %1756 = vmatpush1.msra.mxu0 %v1080
      %1757 = vmatprep.subr.mxu0 0.0
      %1758 = vmatpush1.msra.mxu0 %v1085
      %1759 = vmatprep.subr.mxu0 0.0
      %1760 = vmatpush1.msra.mxu0 %v1090
      %1761 = vmatprep.subr.mxu0 0.0
      %1762 = vmatpush1.msra.mxu0 %v1095
      %1763 = vmatprep.subr.mxu0 0.0
      %1764 = vmatpush1.msra.mxu0 %v1100
      %1765 = vmatprep.subr.mxu0 0.0
      %1766 = vmatpush1.msra.mxu0 %v1105
      %1767 = vmatprep.subr.mxu0 0.0
      %1768 = vmatpush1.msra.mxu0 %v1110
      %1769 = vmatprep.subr.mxu0 0.0
      %1770 = vmatpush1.msra.mxu0 %v1115
      %1771 = vmatprep.subr.mxu0 0.0
      %1772 = vmatpush1.msra.mxu0 %v1120
      %1773 = vmatprep.subr.mxu0 0.0
      %1774 = vmatpush1.msra.mxu0 %v1125
      %1775 = vmatprep.subr.mxu0 0.0
      %1776 = vmatpush1.msra.mxu0 %v1130
      %1777 = vmatprep.subr.mxu0 0.0
      %1778 = vmatpush1.msra.mxu0 %v1135
      %1779 = vmatprep.mubr.f32.mxu0 %v177
      %1780 = vmatmul.mubr.f32.gmra.mrb[0].mxu0 %v176
      %v1781 = vpop.f32.mrb[0].mxu0
      %v1782 = vadd.f32 0.0, %v1781
      %v1783 = vpop.f32.mrb[0].mxu0
      %1784 = vmatprep.mubr.f32.mxu0 %v179
      %1785 = vmatmul.mubr.f32.gmra.mrb[0].mxu0 %v178
      %v1786 = vpop.f32.mrb[0].mxu0
      %v1787 = vadd.f32 0.0, %v1786
      %v1788 = vpop.f32.mrb[0].mxu0
      %1789 = vmatprep.mubr.f32.mxu0 %v181
      %1790 = vmatmul.mubr.f32.gmra.mrb[0].mxu0 %v180
      %v1791 = vpop.f32.mrb[0].mxu0
      %v1792 = vadd.f32 0.0, %v1791
      %v1793 = vpop.f32.mrb[0].mxu0
      %1794 = vmatprep.mubr.f32.mxu0 %v183
      %1795 = vmatmul.mubr.f32.gmra.mrb[0].mxu0 %v182
      %v1796 = vpop.f32.mrb[0].mxu0
      %v1797 = vadd.f32 0.0, %v1796
      %v1798 = vpop.f32.mrb[0].mxu0
      %1799 = vmatprep.mubr.f32.mxu0 %v185
      %1800 = vmatmul.mubr.f32.gmra.mrb[0].mxu0 %v184
      %v1801 = vpop.f32.mrb[0].mxu0
      %v1802 = vadd.f32 0.0, %v1801
      %v1803 = vpop.f32.mrb[0].mxu0
      %1804 = vmatprep.mubr.f32.mxu0 %v187
      %1805 = vmatmul.mubr.f32.gmra.mrb[0].mxu0 %v186
      %v1806 = vpop.f32.mrb[0].mxu0
      %v1807 = vadd.f32 0.0, %v1806
      %v1808 = vpop.f32.mrb[0].mxu0
      %1809 = vmatprep.mubr.f32.mxu0 %v189
      %1810 = vmatmul.mubr.f32.gmra.mrb[0].mxu0 %v188
      %v1811 = vpop.f32.mrb[0].mxu0
      %v1812 = vadd.f32 0.0, %v1811
      %v1813 = vpop.f32.mrb[0].mxu0
      %1814 = vmatprep.mubr.f32.mxu0 %v191
      %1815 = vmatmul.mubr.f32.gmra.mrb[0].mxu0 %v190
      %v1816 = vpop.f32.mrb[0].mxu0
      %v1817 = vadd.f32 0.0, %v1816
      %v1818 = vpop.f32.mrb[0].mxu0
      %1819 = vmatprep.mubr.f32.mxu0 %v193
      %1820 = vmatmul.mubr.f32.gmra.mrb[0].mxu0 %v192
      %v1821 = vpop.f32.mrb[0].mxu0
      %v1822 = vadd.f32 0.0, %v1821
      %v1823 = vpop.f32.mrb[0].mxu0
      %1824 = vmatprep.mubr.f32.mxu0 %v195
      %1825 = vmatmul.mubr.f32.gmra.mrb[0].mxu0 %v194
      %v1826 = vpop.f32.mrb[0].mxu0
      %v1827 = vadd.f32 0.0, %v1826
      %v1828 = vpop.f32.mrb[0].mxu0
      %1829 = vmatprep.mubr.f32.mxu0 %v197
      %1830 = vmatmul.mubr.f32.gmra.mrb[0].mxu0 %v196
      %v1831 = vpop.f32.mrb[0].mxu0
      %v1832 = vadd.f32 0.0, %v1831
      %v1833 = vpop.f32.mrb[0].mxu0
      %1834 = vmatprep.mubr.f32.mxu0 %v199
      %1835 = vmatmul.mubr.f32.gmra.mrb[0].mxu0 %v198
      %v1836 = vpop.f32.mrb[0].mxu0
      %v1837 = vadd.f32 0.0, %v1836
      %v1838 = vpop.f32.mrb[0].mxu0
      %1839 = vmatprep.mubr.f32.mxu0 %v201
      %1840 = vmatmul.mubr.f32.gmra.mrb[0].mxu0 %v200
      %v1841 = vpop.f32.mrb[0].mxu0
      %v1842 = vadd.f32 0.0, %v1841
      %v1843 = vpop.f32.mrb[0].mxu0
      %1844 = vmatprep.mubr.f32.mxu0 %v203
      %1845 = vmatmul.mubr.f32.gmra.mrb[0].mxu0 %v202
      %v1846 = vpop.f32.mrb[0].mxu0
      %v1847 = vadd.f32 0.0, %v1846
      %v1848 = vpop.f32.mrb[0].mxu0
      %1849 = vmatprep.mubr.f32.mxu0 %v205
      %1850 = vmatmul.mubr.f32.gmra.mrb[0].mxu0 %v204
      %v1851 = vpop.f32.mrb[0].mxu0
      %v1852 = vadd.f32 0.0, %v1851
      %v1853 = vpop.f32.mrb[0].mxu0
      %1854 = vmatprep.mubr.f32.mxu0 %v207
      %1855 = vmatmul.mubr.f32.gmra.mrb[0].mxu0 %v206
      %v1856 = vpop.f32.mrb[0].mxu0
      %v1857 = vadd.f32 0.0, %v1856
      %v1858 = vpop.f32.mrb[0].mxu0
      %1859 = vmatprep.mubr.f32.mxu0 %v209
      %1860 = vmatmul.mubr.f32.gmra.mrb[0].mxu0 %v208
      %v1861 = vpop.f32.mrb[0].mxu0
      %v1862 = vadd.f32 0.0, %v1861
      %v1863 = vpop.f32.mrb[0].mxu0
      %1864 = vmatprep.mubr.f32.mxu0 %v211
      %1865 = vmatmul.mubr.f32.gmra.mrb[0].mxu0 %v210
      %v1866 = vpop.f32.mrb[0].mxu0
      %v1867 = vadd.f32 0.0, %v1866
      %v1868 = vpop.f32.mrb[0].mxu0
      %1869 = vmatprep.mubr.f32.mxu0 %v213
      %1870 = vmatmul.mubr.f32.gmra.mrb[0].mxu0 %v212
      %v1871 = vpop.f32.mrb[0].mxu0
      %v1872 = vadd.f32 0.0, %v1871
      %v1873 = vpop.f32.mrb[0].mxu0
      %1874 = vmatprep.mubr.f32.mxu0 %v215
      %1875 = vmatmul.mubr.f32.gmra.mrb[0].mxu0 %v214
      %v1876 = vpop.f32.mrb[0].mxu0
      %v1877 = vadd.f32 0.0, %v1876
      %v1878 = vpop.f32.mrb[0].mxu0
      %1879 = vmatprep.mubr.f32.mxu0 %v217
      %1880 = vmatmul.mubr.f32.gmra.mrb[0].mxu0 %v216
      %v1881 = vpop.f32.mrb[0].mxu0
      %v1882 = vadd.f32 0.0, %v1881
      %v1883 = vpop.f32.mrb[0].mxu0
      %1884 = vmatprep.mubr.f32.mxu0 %v219
      %1885 = vmatmul.mubr.f32.gmra.mrb[0].mxu0 %v218
      %v1886 = vpop.f32.mrb[0].mxu0
      %v1887 = vadd.f32 0.0, %v1886
      %v1888 = vpop.f32.mrb[0].mxu0
      %1889 = vmatprep.mubr.f32.mxu0 %v221
      %1890 = vmatmul.mubr.f32.gmra.mrb[0].mxu0 %v220
      %v1891 = vpop.f32.mrb[0].mxu0
      %v1892 = vadd.f32 0.0, %v1891
      %v1893 = vpop.f32.mrb[0].mxu0
      %1894 = vmatprep.mubr.f32.mxu0 %v223
      %1895 = vmatmul.mubr.f32.gmra.mrb[0].mxu0 %v222
      %v1896 = vpop.f32.mrb[0].mxu0
      %v1897 = vadd.f32 0.0, %v1896
      %v1898 = vpop.f32.mrb[0].mxu0
      %1899 = vmatprep.mubr.f32.mxu0 %v225
      %1900 = vmatmul.mubr.f32.gmra.mrb[0].mxu0 %v224
      %v1901 = vpop.f32.mrb[0].mxu0
      %v1902 = vadd.f32 0.0, %v1901
      %v1903 = vpop.f32.mrb[0].mxu0
      %1904 = vmatprep.mubr.f32.mxu0 %v227
      %1905 = vmatmul.mubr.f32.gmra.mrb[0].mxu0 %v226
      %v1906 = vpop.f32.mrb[0].mxu0
      %v1907 = vadd.f32 0.0, %v1906
      %v1908 = vpop.f32.mrb[0].mxu0
      %1909 = vmatprep.mubr.f32.mxu0 %v229
      %1910 = vmatmul.mubr.f32.gmra.mrb[0].mxu0 %v228
      %v1911 = vpop.f32.mrb[0].mxu0
      %v1912 = vadd.f32 0.0, %v1911
      %v1913 = vpop.f32.mrb[0].mxu0
      %1914 = vmatprep.mubr.f32.mxu0 %v231
      %1915 = vmatmul.mubr.f32.gmra.mrb[0].mxu0 %v230
      %v1916 = vpop.f32.mrb[0].mxu0
      %v1917 = vadd.f32 0.0, %v1916
      %v1918 = vpop.f32.mrb[0].mxu0
      %1919 = vmatprep.mubr.f32.mxu0 %v233
      %1920 = vmatmul.mubr.f32.gmra.mrb[0].mxu0 %v232
      %v1921 = vpop.f32.mrb[0].mxu0
      %v1922 = vadd.f32 0.0, %v1921
      %v1923 = vpop.f32.mrb[0].mxu0
      %1924 = vmatprep.mubr.f32.mxu0 %v235
      %1925 = vmatmul.mubr.f32.gmra.mrb[0].mxu0 %v234
      %v1926 = vpop.f32.mrb[0].mxu0
      %v1927 = vadd.f32 0.0, %v1926
      %v1928 = vpop.f32.mrb[0].mxu0
      %1929 = vmatprep.mubr.f32.mxu0 %v237
      %1930 = vmatmul.mubr.f32.gmra.mrb[0].mxu0 %v236
      %v1931 = vpop.f32.mrb[0].mxu0
      %v1932 = vadd.f32 0.0, %v1931
      %v1933 = vpop.f32.mrb[0].mxu0
      %1934 = vmatprep.mubr.f32.mxu0 %v239
      %1935 = vmatmul.mubr.f32.gmra.mrb[0].mxu0 %v238
      %v1936 = vpop.f32.mrb[0].mxu0
      %v1937 = vadd.f32 0.0, %v1936
      %v1938 = vpop.f32.mrb[0].mxu0
      %1939 = vdwg.mxu0
      %1940 = vst.msk [vmem:[%s172 + $0x100] sm:$0xff] %vm368, %v1782
      %1941 = vst.msk [vmem:[%s172 + $0x108] sm:$0xff] %vm368, %v1787
      %1942 = vst.msk [vmem:[%s172 + $0x110] sm:$0xff] %vm368, %v1792
      %1943 = vst.msk [vmem:[%s172 + $0x118] sm:$0xff] %vm368, %v1797
      %1944 = vst.msk [vmem:[%s172 + $0x120] sm:$0xff] %vm368, %v1802
      %1945 = vst.msk [vmem:[%s172 + $0x128] sm:$0xff] %vm368, %v1807
      %1946 = vst.msk [vmem:[%s172 + $0x130] sm:$0xff] %vm368, %v1812
      %1947 = vst.msk [vmem:[%s172 + $0x138] sm:$0xff] %vm368, %v1817
      %1948 = vst.msk [vmem:[%s172 + $0x140] sm:$0xff] %vm368, %v1822
      %1949 = vst.msk [vmem:[%s172 + $0x148] sm:$0xff] %vm368, %v1827
      %1950 = vst.msk [vmem:[%s172 + $0x150] sm:$0xff] %vm368, %v1832
      %1951 = vst.msk [vmem:[%s172 + $0x158] sm:$0xff] %vm368, %v1837
      %1952 = vst.msk [vmem:[%s172 + $0x160] sm:$0xff] %vm368, %v1842
      %1953 = vst.msk [vmem:[%s172 + $0x168] sm:$0xff] %vm368, %v1847
      %1954 = vst.msk [vmem:[%s172 + $0x170] sm:$0xff] %vm368, %v1852
      %1955 = vst.msk [vmem:[%s172 + $0x178] sm:$0xff] %vm368, %v1857
      %1956 = vst.msk [vmem:[%s172 + $0x180] sm:$0xff] %vm368, %v1862
      %1957 = vst.msk [vmem:[%s172 + $0x188] sm:$0xff] %vm368, %v1867
      %1958 = vst.msk [vmem:[%s172 + $0x190] sm:$0xff] %vm368, %v1872
      %1959 = vst.msk [vmem:[%s172 + $0x198] sm:$0xff] %vm368, %v1877
      %1960 = vst.msk [vmem:[%s172 + $0x1a0] sm:$0xff] %vm368, %v1882
      %1961 = vst.msk [vmem:[%s172 + $0x1a8] sm:$0xff] %vm368, %v1887
      %1962 = vst.msk [vmem:[%s172 + $0x1b0] sm:$0xff] %vm368, %v1892
      %1963 = vst.msk [vmem:[%s172 + $0x1b8] sm:$0xff] %vm368, %v1897
      %1964 = vst.msk [vmem:[%s172 + $0x1c0] sm:$0xff] %vm368, %v1902
      %1965 = vst.msk [vmem:[%s172 + $0x1c8] sm:$0xff] %vm368, %v1907
      %1966 = vst.msk [vmem:[%s172 + $0x1d0] sm:$0xff] %vm368, %v1912
      %1967 = vst.msk [vmem:[%s172 + $0x1d8] sm:$0xff] %vm368, %v1917
      %1968 = vst.msk [vmem:[%s172 + $0x1e0] sm:$0xff] %vm368, %v1922
      %1969 = vst.msk [vmem:[%s172 + $0x1e8] sm:$0xff] %vm368, %v1927
      %1970 = vst.msk [vmem:[%s172 + $0x1f0] sm:$0xff] %vm368, %v1932
      %1971 = vst.msk [vmem:[%s172 + $0x1f8] sm:$0xff] %vm368, %v1937
      %1972 = vmatprep.subr.mxu0 0.0
      %1973 = vmatpush1.msra.mxu0 %v1140
      %1974 = vmatprep.subr.mxu0 0.0
      %1975 = vmatpush1.msra.mxu0 %v1145
      %1976 = vmatprep.subr.mxu0 0.0
      %1977 = vmatpush1.msra.mxu0 %v1150
      %1978 = vmatprep.subr.mxu0 0.0
      %1979 = vmatpush1.msra.mxu0 %v1155
      %1980 = vmatprep.subr.mxu0 0.0
      %1981 = vmatpush1.msra.mxu0 %v1160
      %1982 = vmatprep.subr.mxu0 0.0
      %1983 = vmatpush1.msra.mxu0 %v1165
      %1984 = vmatprep.subr.mxu0 0.0
      %1985 = vmatpush1.msra.mxu0 %v1170
      %1986 = vmatprep.subr.mxu0 0.0
      %1987 = vmatpush1.msra.mxu0 %v1175
      %1988 = vmatprep.subr.mxu0 0.0
      %1989 = vmatpush1.msra.mxu0 %v1180
      %1990 = vmatprep.subr.mxu0 0.0
      %1991 = vmatpush1.msra.mxu0 %v1185
      %1992 = vmatprep.subr.mxu0 0.0
      %1993 = vmatpush1.msra.mxu0 %v1190
      %1994 = vmatprep.subr.mxu0 0.0
      %1995 = vmatpush1.msra.mxu0 %v1195
      %1996 = vmatprep.subr.mxu0 0.0
      %1997 = vmatpush1.msra.mxu0 %v1200
      %1998 = vmatprep.subr.mxu0 0.0
      %1999 = vmatpush1.msra.mxu0 %v1205
      %2000 = vmatprep.subr.mxu0 0.0
      %2001 = vmatpush1.msra.mxu0 %v1210
      %2002 = vmatprep.subr.mxu0 0.0
      %2003 = vmatpush1.msra.mxu0 %v1215
      %2004 = vmatprep.subr.mxu0 0.0
      %2005 = vmatpush1.msra.mxu0 %v1220
      %2006 = vmatprep.subr.mxu0 0.0
      %2007 = vmatpush1.msra.mxu0 %v1225
      %2008 = vmatprep.subr.mxu0 0.0
      %2009 = vmatpush1.msra.mxu0 %v1230
      %2010 = vmatprep.subr.mxu0 0.0
      %2011 = vmatpush1.msra.mxu0 %v1235
      %2012 = vmatprep.subr.mxu0 0.0
      %2013 = vmatpush1.msra.mxu0 %v1240
      %2014 = vmatprep.subr.mxu0 0.0
      %2015 = vmatpush1.msra.mxu0 %v1245
      %2016 = vmatprep.subr.mxu0 0.0
      %2017 = vmatpush1.msra.mxu0 %v1250
      %2018 = vmatprep.subr.mxu0 0.0
      %2019 = vmatpush1.msra.mxu0 %v1255
      %2020 = vmatprep.subr.mxu0 0.0
      %2021 = vmatpush1.msra.mxu0 %v1260
      %2022 = vmatprep.subr.mxu0 0.0
      %2023 = vmatpush1.msra.mxu0 %v1265
      %2024 = vmatprep.subr.mxu0 0.0
      %2025 = vmatpush1.msra.mxu0 %v1270
      %2026 = vmatprep.subr.mxu0 0.0
      %2027 = vmatpush1.msra.mxu0 %v1275
      %2028 = vmatprep.subr.mxu0 0.0
      %2029 = vmatpush1.msra.mxu0 %v1280
      %2030 = vmatprep.subr.mxu0 0.0
      %2031 = vmatpush1.msra.mxu0 %v1285
      %2032 = vmatprep.subr.mxu0 0.0
      %2033 = vmatpush1.msra.mxu0 %v1290
      %2034 = vmatprep.subr.mxu0 0.0
      %2035 = vmatpush1.msra.mxu0 %v1295
      %2036 = vmatprep.mubr.f32.mxu0 %v177
      %2037 = vmatmul.mubr.f32.gmra.mrb[0].mxu0 %v176
      %v2038 = vpop.f32.mrb[0].mxu0
      %v2039 = vadd.f32 0.0, %v2038
      %v2040 = vpop.f32.mrb[0].mxu0
      %2041 = vmatprep.mubr.f32.mxu0 %v179
      %2042 = vmatmul.mubr.f32.gmra.mrb[0].mxu0 %v178
      %v2043 = vpop.f32.mrb[0].mxu0
      %v2044 = vadd.f32 0.0, %v2043
      %v2045 = vpop.f32.mrb[0].mxu0
      %2046 = vmatprep.mubr.f32.mxu0 %v181
      %2047 = vmatmul.mubr.f32.gmra.mrb[0].mxu0 %v180
      %v2048 = vpop.f32.mrb[0].mxu0
      %v2049 = vadd.f32 0.0, %v2048
      %v2050 = vpop.f32.mrb[0].mxu0
      %2051 = vmatprep.mubr.f32.mxu0 %v183
      %2052 = vmatmul.mubr.f32.gmra.mrb[0].mxu0 %v182
      %v2053 = vpop.f32.mrb[0].mxu0
      %v2054 = vadd.f32 0.0, %v2053
      %v2055 = vpop.f32.mrb[0].mxu0
      %2056 = vmatprep.mubr.f32.mxu0 %v185
      %2057 = vmatmul.mubr.f32.gmra.mrb[0].mxu0 %v184
      %v2058 = vpop.f32.mrb[0].mxu0
      %v2059 = vadd.f32 0.0, %v2058
      %v2060 = vpop.f32.mrb[0].mxu0
      %2061 = vmatprep.mubr.f32.mxu0 %v187
      %2062 = vmatmul.mubr.f32.gmra.mrb[0].mxu0 %v186
      %v2063 = vpop.f32.mrb[0].mxu0
      %v2064 = vadd.f32 0.0, %v2063
      %v2065 = vpop.f32.mrb[0].mxu0
      %2066 = vmatprep.mubr.f32.mxu0 %v189
      %2067 = vmatmul.mubr.f32.gmra.mrb[0].mxu0 %v188
      %v2068 = vpop.f32.mrb[0].mxu0
      %v2069 = vadd.f32 0.0, %v2068
      %v2070 = vpop.f32.mrb[0].mxu0
      %2071 = vmatprep.mubr.f32.mxu0 %v191
      %2072 = vmatmul.mubr.f32.gmra.mrb[0].mxu0 %v190
      %v2073 = vpop.f32.mrb[0].mxu0
      %v2074 = vadd.f32 0.0, %v2073
      %v2075 = vpop.f32.mrb[0].mxu0
      %2076 = vmatprep.mubr.f32.mxu0 %v193
      %2077 = vmatmul.mubr.f32.gmra.mrb[0].mxu0 %v192
      %v2078 = vpop.f32.mrb[0].mxu0
      %v2079 = vadd.f32 0.0, %v2078
      %v2080 = vpop.f32.mrb[0].mxu0
      %2081 = vmatprep.mubr.f32.mxu0 %v195
      %2082 = vmatmul.mubr.f32.gmra.mrb[0].mxu0 %v194
      %v2083 = vpop.f32.mrb[0].mxu0
      %v2084 = vadd.f32 0.0, %v2083
      %v2085 = vpop.f32.mrb[0].mxu0
      %2086 = vmatprep.mubr.f32.mxu0 %v197
      %2087 = vmatmul.mubr.f32.gmra.mrb[0].mxu0 %v196
      %v2088 = vpop.f32.mrb[0].mxu0
      %v2089 = vadd.f32 0.0, %v2088
      %v2090 = vpop.f32.mrb[0].mxu0
      %2091 = vmatprep.mubr.f32.mxu0 %v199
      %2092 = vmatmul.mubr.f32.gmra.mrb[0].mxu0 %v198
      %v2093 = vpop.f32.mrb[0].mxu0
      %v2094 = vadd.f32 0.0, %v2093
      %v2095 = vpop.f32.mrb[0].mxu0
      %2096 = vmatprep.mubr.f32.mxu0 %v201
      %2097 = vmatmul.mubr.f32.gmra.mrb[0].mxu0 %v200
      %v2098 = vpop.f32.mrb[0].mxu0
      %v2099 = vadd.f32 0.0, %v2098
      %v2100 = vpop.f32.mrb[0].mxu0
      %2101 = vmatprep.mubr.f32.mxu0 %v203
      %2102 = vmatmul.mubr.f32.gmra.mrb[0].mxu0 %v202
      %v2103 = vpop.f32.mrb[0].mxu0
      %v2104 = vadd.f32 0.0, %v2103
      %v2105 = vpop.f32.mrb[0].mxu0
      %2106 = vmatprep.mubr.f32.mxu0 %v205
      %2107 = vmatmul.mubr.f32.gmra.mrb[0].mxu0 %v204
      %v2108 = vpop.f32.mrb[0].mxu0
      %v2109 = vadd.f32 0.0, %v2108
      %v2110 = vpop.f32.mrb[0].mxu0
      %2111 = vmatprep.mubr.f32.mxu0 %v207
      %2112 = vmatmul.mubr.f32.gmra.mrb[0].mxu0 %v206
      %v2113 = vpop.f32.mrb[0].mxu0
      %v2114 = vadd.f32 0.0, %v2113
      %v2115 = vpop.f32.mrb[0].mxu0
      %2116 = vmatprep.mubr.f32.mxu0 %v209
      %2117 = vmatmul.mubr.f32.gmra.mrb[0].mxu0 %v208
      %v2118 = vpop.f32.mrb[0].mxu0
      %v2119 = vadd.f32 0.0, %v2118
      %v2120 = vpop.f32.mrb[0].mxu0
      %2121 = vmatprep.mubr.f32.mxu0 %v211
      %2122 = vmatmul.mubr.f32.gmra.mrb[0].mxu0 %v210
      %v2123 = vpop.f32.mrb[0].mxu0
      %v2124 = vadd.f32 0.0, %v2123
      %v2125 = vpop.f32.mrb[0].mxu0
      %2126 = vmatprep.mubr.f32.mxu0 %v213
      %2127 = vmatmul.mubr.f32.gmra.mrb[0].mxu0 %v212
      %v2128 = vpop.f32.mrb[0].mxu0
      %v2129 = vadd.f32 0.0, %v2128
      %v2130 = vpop.f32.mrb[0].mxu0
      %2131 = vmatprep.mubr.f32.mxu0 %v215
      %2132 = vmatmul.mubr.f32.gmra.mrb[0].mxu0 %v214
      %v2133 = vpop.f32.mrb[0].mxu0
      %v2134 = vadd.f32 0.0, %v2133
      %v2135 = vpop.f32.mrb[0].mxu0
      %2136 = vmatprep.mubr.f32.mxu0 %v217
      %2137 = vmatmul.mubr.f32.gmra.mrb[0].mxu0 %v216
      %v2138 = vpop.f32.mrb[0].mxu0
      %v2139 = vadd.f32 0.0, %v2138
      %v2140 = vpop.f32.mrb[0].mxu0
      %2141 = vmatprep.mubr.f32.mxu0 %v219
      %2142 = vmatmul.mubr.f32.gmra.mrb[0].mxu0 %v218
      %v2143 = vpop.f32.mrb[0].mxu0
      %v2144 = vadd.f32 0.0, %v2143
      %v2145 = vpop.f32.mrb[0].mxu0
      %2146 = vmatprep.mubr.f32.mxu0 %v221
      %2147 = vmatmul.mubr.f32.gmra.mrb[0].mxu0 %v220
      %v2148 = vpop.f32.mrb[0].mxu0
      %v2149 = vadd.f32 0.0, %v2148
      %v2150 = vpop.f32.mrb[0].mxu0
      %2151 = vmatprep.mubr.f32.mxu0 %v223
      %2152 = vmatmul.mubr.f32.gmra.mrb[0].mxu0 %v222
      %v2153 = vpop.f32.mrb[0].mxu0
      %v2154 = vadd.f32 0.0, %v2153
      %v2155 = vpop.f32.mrb[0].mxu0
      %2156 = vmatprep.mubr.f32.mxu0 %v225
      %2157 = vmatmul.mubr.f32.gmra.mrb[0].mxu0 %v224
      %v2158 = vpop.f32.mrb[0].mxu0
      %v2159 = vadd.f32 0.0, %v2158
      %v2160 = vpop.f32.mrb[0].mxu0
      %2161 = vmatprep.mubr.f32.mxu0 %v227
      %2162 = vmatmul.mubr.f32.gmra.mrb[0].mxu0 %v226
      %v2163 = vpop.f32.mrb[0].mxu0
      %v2164 = vadd.f32 0.0, %v2163
      %v2165 = vpop.f32.mrb[0].mxu0
      %2166 = vmatprep.mubr.f32.mxu0 %v229
      %2167 = vmatmul.mubr.f32.gmra.mrb[0].mxu0 %v228
      %v2168 = vpop.f32.mrb[0].mxu0
      %v2169 = vadd.f32 0.0, %v2168
      %v2170 = vpop.f32.mrb[0].mxu0
      %2171 = vmatprep.mubr.f32.mxu0 %v231
      %2172 = vmatmul.mubr.f32.gmra.mrb[0].mxu0 %v230
      %v2173 = vpop.f32.mrb[0].mxu0
      %v2174 = vadd.f32 0.0, %v2173
      %v2175 = vpop.f32.mrb[0].mxu0
      %2176 = vmatprep.mubr.f32.mxu0 %v233
      %2177 = vmatmul.mubr.f32.gmra.mrb[0].mxu0 %v232
      %v2178 = vpop.f32.mrb[0].mxu0
      %v2179 = vadd.f32 0.0, %v2178
      %v2180 = vpop.f32.mrb[0].mxu0
      %2181 = vmatprep.mubr.f32.mxu0 %v235
      %2182 = vmatmul.mubr.f32.gmra.mrb[0].mxu0 %v234
      %v2183 = vpop.f32.mrb[0].mxu0
      %v2184 = vadd.f32 0.0, %v2183
      %v2185 = vpop.f32.mrb[0].mxu0
      %2186 = vmatprep.mubr.f32.mxu0 %v237
      %2187 = vmatmul.mubr.f32.gmra.mrb[0].mxu0 %v236
      %v2188 = vpop.f32.mrb[0].mxu0
      %v2189 = vadd.f32 0.0, %v2188
      %v2190 = vpop.f32.mrb[0].mxu0
      %2191 = vmatprep.mubr.f32.mxu0 %v239
      %2192 = vmatmul.mubr.f32.gmra.mrb[0].mxu0 %v238
      %v2193 = vpop.f32.mrb[0].mxu0
      %v2194 = vadd.f32 0.0, %v2193
      %v2195 = vpop.f32.mrb[0].mxu0
      %2196 = vdwg.mxu0
      %2197 = vst.msk [vmem:[%s172 + $0x200] sm:$0xff] %vm368, %v2039
      %2198 = vst.msk [vmem:[%s172 + $0x208] sm:$0xff] %vm368, %v2044
      %2199 = vst.msk [vmem:[%s172 + $0x210] sm:$0xff] %vm368, %v2049
      %2200 = vst.msk [vmem:[%s172 + $0x218] sm:$0xff] %vm368, %v2054
      %2201 = vst.msk [vmem:[%s172 + $0x220] sm:$0xff] %vm368, %v2059
      %2202 = vst.msk [vmem:[%s172 + $0x228] sm:$0xff] %vm368, %v2064
      %2203 = vst.msk [vmem:[%s172 + $0x230] sm:$0xff] %vm368, %v2069
      %2204 = vst.msk [vmem:[%s172 + $0x238] sm:$0xff] %vm368, %v2074
      %2205 = vst.msk [vmem:[%s172 + $0x240] sm:$0xff] %vm368, %v2079
      %2206 = vst.msk [vmem:[%s172 + $0x248] sm:$0xff] %vm368, %v2084
      %2207 = vst.msk [vmem:[%s172 + $0x250] sm:$0xff] %vm368, %v2089
      %2208 = vst.msk [vmem:[%s172 + $0x258] sm:$0xff] %vm368, %v2094
      %2209 = vst.msk [vmem:[%s172 + $0x260] sm:$0xff] %vm368, %v2099
      %2210 = vst.msk [vmem:[%s172 + $0x268] sm:$0xff] %vm368, %v2104
      %2211 = vst.msk [vmem:[%s172 + $0x270] sm:$0xff] %vm368, %v2109
      %2212 = vst.msk [vmem:[%s172 + $0x278] sm:$0xff] %vm368, %v2114
      %2213 = vst.msk [vmem:[%s172 + $0x280] sm:$0xff] %vm368, %v2119
      %2214 = vst.msk [vmem:[%s172 + $0x288] sm:$0xff] %vm368, %v2124
      %2215 = vst.msk [vmem:[%s172 + $0x290] sm:$0xff] %vm368, %v2129
      %2216 = vst.msk [vmem:[%s172 + $0x298] sm:$0xff] %vm368, %v2134
      %2217 = vst.msk [vmem:[%s172 + $0x2a0] sm:$0xff] %vm368, %v2139
      %2218 = vst.msk [vmem:[%s172 + $0x2a8] sm:$0xff] %vm368, %v2144
      %2219 = vst.msk [vmem:[%s172 + $0x2b0] sm:$0xff] %vm368, %v2149
      %2220 = vst.msk [vmem:[%s172 + $0x2b8] sm:$0xff] %vm368, %v2154
      %2221 = vst.msk [vmem:[%s172 + $0x2c0] sm:$0xff] %vm368, %v2159
      %2222 = vst.msk [vmem:[%s172 + $0x2c8] sm:$0xff] %vm368, %v2164
      %2223 = vst.msk [vmem:[%s172 + $0x2d0] sm:$0xff] %vm368, %v2169
      %2224 = vst.msk [vmem:[%s172 + $0x2d8] sm:$0xff] %vm368, %v2174
      %2225 = vst.msk [vmem:[%s172 + $0x2e0] sm:$0xff] %vm368, %v2179
      %2226 = vst.msk [vmem:[%s172 + $0x2e8] sm:$0xff] %vm368, %v2184
      %2227 = vst.msk [vmem:[%s172 + $0x2f0] sm:$0xff] %vm368, %v2189
      %2228 = vst.msk [vmem:[%s172 + $0x2f8] sm:$0xff] %vm368, %v2194
      %2229 = vmatprep.subr.mxu0 0.0
      %2230 = vmatpush1.msra.mxu0 %v1300
      %2231 = vmatprep.subr.mxu0 0.0
      %2232 = vmatpush1.msra.mxu0 %v1305
      %2233 = vmatprep.subr.mxu0 0.0
      %2234 = vmatpush1.msra.mxu0 %v1310
      %2235 = vmatprep.subr.mxu0 0.0
      %2236 = vmatpush1.msra.mxu0 %v1315
      %2237 = vmatprep.subr.mxu0 0.0
      %2238 = vmatpush1.msra.mxu0 %v1320
      %2239 = vmatprep.subr.mxu0 0.0
      %2240 = vmatpush1.msra.mxu0 %v1325
      %2241 = vmatprep.subr.mxu0 0.0
      %2242 = vmatpush1.msra.mxu0 %v1330
      %2243 = vmatprep.subr.mxu0 0.0
      %2244 = vmatpush1.msra.mxu0 %v1335
      %2245 = vmatprep.subr.mxu0 0.0
      %2246 = vmatpush1.msra.mxu0 %v1340
      %2247 = vmatprep.subr.mxu0 0.0
      %2248 = vmatpush1.msra.mxu0 %v1345
      %2249 = vmatprep.subr.mxu0 0.0
      %2250 = vmatpush1.msra.mxu0 %v1350
      %2251 = vmatprep.subr.mxu0 0.0
      %2252 = vmatpush1.msra.mxu0 %v1355
      %2253 = vmatprep.subr.mxu0 0.0
      %2254 = vmatpush1.msra.mxu0 %v1360
      %2255 = vmatprep.subr.mxu0 0.0
      %2256 = vmatpush1.msra.mxu0 %v1365
      %2257 = vmatprep.subr.mxu0 0.0
      %2258 = vmatpush1.msra.mxu0 %v1370
      %2259 = vmatprep.subr.mxu0 0.0
      %2260 = vmatpush1.msra.mxu0 %v1375
      %2261 = vmatprep.subr.mxu0 0.0
      %2262 = vmatpush1.msra.mxu0 %v1380
      %2263 = vmatprep.subr.mxu0 0.0
      %2264 = vmatpush1.msra.mxu0 %v1385
      %2265 = vmatprep.subr.mxu0 0.0
      %2266 = vmatpush1.msra.mxu0 %v1390
      %2267 = vmatprep.subr.mxu0 0.0
      %2268 = vmatpush1.msra.mxu0 %v1395
      %2269 = vmatprep.subr.mxu0 0.0
      %2270 = vmatpush1.msra.mxu0 %v1400
      %2271 = vmatprep.subr.mxu0 0.0
      %2272 = vmatpush1.msra.mxu0 %v1405
      %2273 = vmatprep.subr.mxu0 0.0
      %2274 = vmatpush1.msra.mxu0 %v1410
      %2275 = vmatprep.subr.mxu0 0.0
      %2276 = vmatpush1.msra.mxu0 %v1415
      %2277 = vmatprep.subr.mxu0 0.0
      %2278 = vmatpush1.msra.mxu0 %v1420
      %2279 = vmatprep.subr.mxu0 0.0
      %2280 = vmatpush1.msra.mxu0 %v1425
      %2281 = vmatprep.subr.mxu0 0.0
      %2282 = vmatpush1.msra.mxu0 %v1430
      %2283 = vmatprep.subr.mxu0 0.0
      %2284 = vmatpush1.msra.mxu0 %v1435
      %2285 = vmatprep.subr.mxu0 0.0
      %2286 = vmatpush1.msra.mxu0 %v1440
      %2287 = vmatprep.subr.mxu0 0.0
      %2288 = vmatpush1.msra.mxu0 %v1445
      %2289 = vmatprep.subr.mxu0 0.0
      %2290 = vmatpush1.msra.mxu0 %v1450
      %2291 = vmatprep.subr.mxu0 0.0
      %2292 = vmatpush1.msra.mxu0 %v1455
      %2293 = vmatprep.mubr.f32.mxu0 %v177
      %2294 = vmatmul.mubr.f32.gmra.mrb[0].mxu0 %v176
      %v2295 = vpop.f32.mrb[0].mxu0
      %v2296 = vadd.f32 0.0, %v2295
      %v2297 = vpop.f32.mrb[0].mxu0
      %2298 = vmatprep.mubr.f32.mxu0 %v179
      %2299 = vmatmul.mubr.f32.gmra.mrb[0].mxu0 %v178
      %v2300 = vpop.f32.mrb[0].mxu0
      %v2301 = vadd.f32 0.0, %v2300
      %v2302 = vpop.f32.mrb[0].mxu0
      %2303 = vmatprep.mubr.f32.mxu0 %v181
      %2304 = vmatmul.mubr.f32.gmra.mrb[0].mxu0 %v180
      %v2305 = vpop.f32.mrb[0].mxu0
      %v2306 = vadd.f32 0.0, %v2305
      %v2307 = vpop.f32.mrb[0].mxu0
      %2308 = vmatprep.mubr.f32.mxu0 %v183
      %2309 = vmatmul.mubr.f32.gmra.mrb[0].mxu0 %v182
      %v2310 = vpop.f32.mrb[0].mxu0
      %v2311 = vadd.f32 0.0, %v2310
      %v2312 = vpop.f32.mrb[0].mxu0
      %2313 = vmatprep.mubr.f32.mxu0 %v185
      %2314 = vmatmul.mubr.f32.gmra.mrb[0].mxu0 %v184
      %v2315 = vpop.f32.mrb[0].mxu0
      %v2316 = vadd.f32 0.0, %v2315
      %v2317 = vpop.f32.mrb[0].mxu0
      %2318 = vmatprep.mubr.f32.mxu0 %v187
      %2319 = vmatmul.mubr.f32.gmra.mrb[0].mxu0 %v186
      %v2320 = vpop.f32.mrb[0].mxu0
      %v2321 = vadd.f32 0.0, %v2320
      %v2322 = vpop.f32.mrb[0].mxu0
      %2323 = vmatprep.mubr.f32.mxu0 %v189
      %2324 = vmatmul.mubr.f32.gmra.mrb[0].mxu0 %v188
      %v2325 = vpop.f32.mrb[0].mxu0
      %v2326 = vadd.f32 0.0, %v2325
      %v2327 = vpop.f32.mrb[0].mxu0
      %2328 = vmatprep.mubr.f32.mxu0 %v191
      %2329 = vmatmul.mubr.f32.gmra.mrb[0].mxu0 %v190
      %v2330 = vpop.f32.mrb[0].mxu0
      %v2331 = vadd.f32 0.0, %v2330
      %v2332 = vpop.f32.mrb[0].mxu0
      %2333 = vmatprep.mubr.f32.mxu0 %v193
      %2334 = vmatmul.mubr.f32.gmra.mrb[0].mxu0 %v192
      %v2335 = vpop.f32.mrb[0].mxu0
      %v2336 = vadd.f32 0.0, %v2335
      %v2337 = vpop.f32.mrb[0].mxu0
      %2338 = vmatprep.mubr.f32.mxu0 %v195
      %2339 = vmatmul.mubr.f32.gmra.mrb[0].mxu0 %v194
      %v2340 = vpop.f32.mrb[0].mxu0
      %v2341 = vadd.f32 0.0, %v2340
      %v2342 = vpop.f32.mrb[0].mxu0
      %2343 = vmatprep.mubr.f32.mxu0 %v197
      %2344 = vmatmul.mubr.f32.gmra.mrb[0].mxu0 %v196
      %v2345 = vpop.f32.mrb[0].mxu0
      %v2346 = vadd.f32 0.0, %v2345
      %v2347 = vpop.f32.mrb[0].mxu0
      %2348 = vmatprep.mubr.f32.mxu0 %v199
      %2349 = vmatmul.mubr.f32.gmra.mrb[0].mxu0 %v198
      %v2350 = vpop.f32.mrb[0].mxu0
      %v2351 = vadd.f32 0.0, %v2350
      %v2352 = vpop.f32.mrb[0].mxu0
      %2353 = vmatprep.mubr.f32.mxu0 %v201
      %2354 = vmatmul.mubr.f32.gmra.mrb[0].mxu0 %v200
      %v2355 = vpop.f32.mrb[0].mxu0
      %v2356 = vadd.f32 0.0, %v2355
      %v2357 = vpop.f32.mrb[0].mxu0
      %2358 = vmatprep.mubr.f32.mxu0 %v203
      %2359 = vmatmul.mubr.f32.gmra.mrb[0].mxu0 %v202
      %v2360 = vpop.f32.mrb[0].mxu0
      %v2361 = vadd.f32 0.0, %v2360
      %v2362 = vpop.f32.mrb[0].mxu0
      %2363 = vmatprep.mubr.f32.mxu0 %v205
      %2364 = vmatmul.mubr.f32.gmra.mrb[0].mxu0 %v204
      %v2365 = vpop.f32.mrb[0].mxu0
      %v2366 = vadd.f32 0.0, %v2365
      %v2367 = vpop.f32.mrb[0].mxu0
      %2368 = vmatprep.mubr.f32.mxu0 %v207
      %2369 = vmatmul.mubr.f32.gmra.mrb[0].mxu0 %v206
      %v2370 = vpop.f32.mrb[0].mxu0
      %v2371 = vadd.f32 0.0, %v2370
      %v2372 = vpop.f32.mrb[0].mxu0
      %2373 = vmatprep.mubr.f32.mxu0 %v209
      %2374 = vmatmul.mubr.f32.gmra.mrb[0].mxu0 %v208
      %v2375 = vpop.f32.mrb[0].mxu0
      %v2376 = vadd.f32 0.0, %v2375
      %v2377 = vpop.f32.mrb[0].mxu0
      %2378 = vmatprep.mubr.f32.mxu0 %v211
      %2379 = vmatmul.mubr.f32.gmra.mrb[0].mxu0 %v210
      %v2380 = vpop.f32.mrb[0].mxu0
      %v2381 = vadd.f32 0.0, %v2380
      %v2382 = vpop.f32.mrb[0].mxu0
      %2383 = vmatprep.mubr.f32.mxu0 %v213
      %2384 = vmatmul.mubr.f32.gmra.mrb[0].mxu0 %v212
      %v2385 = vpop.f32.mrb[0].mxu0
      %v2386 = vadd.f32 0.0, %v2385
      %v2387 = vpop.f32.mrb[0].mxu0
      %2388 = vmatprep.mubr.f32.mxu0 %v215
      %2389 = vmatmul.mubr.f32.gmra.mrb[0].mxu0 %v214
      %v2390 = vpop.f32.mrb[0].mxu0
      %v2391 = vadd.f32 0.0, %v2390
      %v2392 = vpop.f32.mrb[0].mxu0
      %2393 = vmatprep.mubr.f32.mxu0 %v217
      %2394 = vmatmul.mubr.f32.gmra.mrb[0].mxu0 %v216
      %v2395 = vpop.f32.mrb[0].mxu0
      %v2396 = vadd.f32 0.0, %v2395
      %v2397 = vpop.f32.mrb[0].mxu0
      %2398 = vmatprep.mubr.f32.mxu0 %v219
      %2399 = vmatmul.mubr.f32.gmra.mrb[0].mxu0 %v218
      %v2400 = vpop.f32.mrb[0].mxu0
      %v2401 = vadd.f32 0.0, %v2400
      %v2402 = vpop.f32.mrb[0].mxu0
      %2403 = vmatprep.mubr.f32.mxu0 %v221
      %2404 = vmatmul.mubr.f32.gmra.mrb[0].mxu0 %v220
      %v2405 = vpop.f32.mrb[0].mxu0
      %v2406 = vadd.f32 0.0, %v2405
      %v2407 = vpop.f32.mrb[0].mxu0
      %2408 = vmatprep.mubr.f32.mxu0 %v223
      %2409 = vmatmul.mubr.f32.gmra.mrb[0].mxu0 %v222
      %v2410 = vpop.f32.mrb[0].mxu0
      %v2411 = vadd.f32 0.0, %v2410
      %v2412 = vpop.f32.mrb[0].mxu0
      %2413 = vmatprep.mubr.f32.mxu0 %v225
      %2414 = vmatmul.mubr.f32.gmra.mrb[0].mxu0 %v224
      %v2415 = vpop.f32.mrb[0].mxu0
      %v2416 = vadd.f32 0.0, %v2415
      %v2417 = vpop.f32.mrb[0].mxu0
      %2418 = vmatprep.mubr.f32.mxu0 %v227
      %2419 = vmatmul.mubr.f32.gmra.mrb[0].mxu0 %v226
      %v2420 = vpop.f32.mrb[0].mxu0
      %v2421 = vadd.f32 0.0, %v2420
      %v2422 = vpop.f32.mrb[0].mxu0
      %2423 = vmatprep.mubr.f32.mxu0 %v229
      %2424 = vmatmul.mubr.f32.gmra.mrb[0].mxu0 %v228
      %v2425 = vpop.f32.mrb[0].mxu0
      %v2426 = vadd.f32 0.0, %v2425
      %v2427 = vpop.f32.mrb[0].mxu0
      %2428 = vmatprep.mubr.f32.mxu0 %v231
      %2429 = vmatmul.mubr.f32.gmra.mrb[0].mxu0 %v230
      %v2430 = vpop.f32.mrb[0].mxu0
      %v2431 = vadd.f32 0.0, %v2430
      %v2432 = vpop.f32.mrb[0].mxu0
      %2433 = vmatprep.mubr.f32.mxu0 %v233
      %2434 = vmatmul.mubr.f32.gmra.mrb[0].mxu0 %v232
      %v2435 = vpop.f32.mrb[0].mxu0
      %v2436 = vadd.f32 0.0, %v2435
      %v2437 = vpop.f32.mrb[0].mxu0
      %2438 = vmatprep.mubr.f32.mxu0 %v235
      %2439 = vmatmul.mubr.f32.gmra.mrb[0].mxu0 %v234
      %v2440 = vpop.f32.mrb[0].mxu0
      %v2441 = vadd.f32 0.0, %v2440
      %v2442 = vpop.f32.mrb[0].mxu0
      %2443 = vmatprep.mubr.f32.mxu0 %v237
      %2444 = vmatmul.mubr.f32.gmra.mrb[0].mxu0 %v236
      %v2445 = vpop.f32.mrb[0].mxu0
      %v2446 = vadd.f32 0.0, %v2445
      %v2447 = vpop.f32.mrb[0].mxu0
      %2448 = vmatprep.mubr.f32.mxu0 %v239
      %2449 = vmatmul.mubr.f32.gmra.mrb[0].mxu0 %v238
      %v2450 = vpop.f32.mrb[0].mxu0
      %v2451 = vadd.f32 0.0, %v2450
      %v2452 = vpop.f32.mrb[0].mxu0
      %2453 = vdwg.mxu0
      %2454 = vst.msk [vmem:[%s172 + $0x300] sm:$0xff] %vm368, %v2296
      %2455 = vst.msk [vmem:[%s172 + $0x308] sm:$0xff] %vm368, %v2301
      %2456 = vst.msk [vmem:[%s172 + $0x310] sm:$0xff] %vm368, %v2306
      %2457 = vst.msk [vmem:[%s172 + $0x318] sm:$0xff] %vm368, %v2311
      %2458 = vst.msk [vmem:[%s172 + $0x320] sm:$0xff] %vm368, %v2316
      %2459 = vst.msk [vmem:[%s172 + $0x328] sm:$0xff] %vm368, %v2321
      %2460 = vst.msk [vmem:[%s172 + $0x330] sm:$0xff] %vm368, %v2326
      %2461 = vst.msk [vmem:[%s172 + $0x338] sm:$0xff] %vm368, %v2331
      %2462 = vst.msk [vmem:[%s172 + $0x340] sm:$0xff] %vm368, %v2336
      %2463 = vst.msk [vmem:[%s172 + $0x348] sm:$0xff] %vm368, %v2341
      %2464 = vst.msk [vmem:[%s172 + $0x350] sm:$0xff] %vm368, %v2346
      %2465 = vst.msk [vmem:[%s172 + $0x358] sm:$0xff] %vm368, %v2351
      %2466 = vst.msk [vmem:[%s172 + $0x360] sm:$0xff] %vm368, %v2356
      %2467 = vst.msk [vmem:[%s172 + $0x368] sm:$0xff] %vm368, %v2361
      %2468 = vst.msk [vmem:[%s172 + $0x370] sm:$0xff] %vm368, %v2366
      %2469 = vst.msk [vmem:[%s172 + $0x378] sm:$0xff] %vm368, %v2371
      %2470 = vst.msk [vmem:[%s172 + $0x380] sm:$0xff] %vm368, %v2376
      %2471 = vst.msk [vmem:[%s172 + $0x388] sm:$0xff] %vm368, %v2381
      %2472 = vst.msk [vmem:[%s172 + $0x390] sm:$0xff] %vm368, %v2386
      %2473 = vst.msk [vmem:[%s172 + $0x398] sm:$0xff] %vm368, %v2391
      %2474 = vst.msk [vmem:[%s172 + $0x3a0] sm:$0xff] %vm368, %v2396
      %2475 = vst.msk [vmem:[%s172 + $0x3a8] sm:$0xff] %vm368, %v2401
      %2476 = vst.msk [vmem:[%s172 + $0x3b0] sm:$0xff] %vm368, %v2406
      %2477 = vst.msk [vmem:[%s172 + $0x3b8] sm:$0xff] %vm368, %v2411
      %2478 = vst.msk [vmem:[%s172 + $0x3c0] sm:$0xff] %vm368, %v2416
      %2479 = vst.msk [vmem:[%s172 + $0x3c8] sm:$0xff] %vm368, %v2421
      %2480 = vst.msk [vmem:[%s172 + $0x3d0] sm:$0xff] %vm368, %v2426
      %2481 = vst.msk [vmem:[%s172 + $0x3d8] sm:$0xff] %vm368, %v2431
      %2482 = vst.msk [vmem:[%s172 + $0x3e0] sm:$0xff] %vm368, %v2436
      %2483 = vst.msk [vmem:[%s172 + $0x3e8] sm:$0xff] %vm368, %v2441
      %2484 = vst.msk [vmem:[%s172 + $0x3f0] sm:$0xff] %vm368, %v2446
      %2485 = vst.msk [vmem:[%s172 + $0x3f8] sm:$0xff] %vm368, %v2451
      %s2486 = smul.u32 128, %s14
      %p2487 = scmp.lt.s32.totalorder %s2486, 255
      %s2488 = scalar_select %p2487, %s2486, 255
      %s2489 = smul.addr %s2488, 8
      %s2490 = scalar_lea.vmem %s3, %s2489
      // Predicated region
      $region33: #{operator2_forward.1} parent=31 // pred_check
        %p2491 = pneg %p100
      $region34: #{operator2_forward.1} parent=31 // pred_check_branch
        %2493 = sbr.rel (%p2491) target = $region36
      $region35: #{operator2_forward.1} parent=31 // pred_region
        %s2494 = smul.u32 128, %s14
      $region36: #{operator2_forward.1} parent=31 // pred_fallthru
        _
    $region32: #{operator2_forward.1} parent=5 // pred_fallthru
      _
    %p2495 = scmp.le.s32.totalorder 2, %s9
    // Predicated region
    $region37: #{operator2_forward.1} parent=5 // pred_check
      %p2496 = pneg %p2495
    $region38: #{operator2_forward.1} parent=5 // pred_check_branch
      %2498 = sbr.rel (%p2496) target = $region40
    $region39: #{operator2_forward.1} parent=5 // pred_region
      %s2499 = ssub.s32 %s9, 2
      // Predicated region
      $region41: #{operator2_forward.1} parent=39 // pred_check
        %p2500 = pneg %p106
      $region42: #{operator2_forward.1} parent=39 // pred_check_branch
        %2502 = sbr.rel (%p2500) target = $region44
      $region43: #{operator2_forward.1} parent=39 // pred_region
        %s2503 = smul.u32 128, %s15
        %p2504 = scmp.lt.s32.totalorder %s2503, 255
        %s2505 = scalar_select %p2504, %s2503, 255
        %s2506 = smul.addr %s2505, 8
        %s2507 = scalar_lea.vmem %s3, %s2506
      $region44: #{operator2_forward.1} parent=39 // pred_fallthru
        _
    $region40: #{operator2_forward.1} parent=5 // pred_fallthru
      _
  $region6: #{operator2_forward.1} parent=0 // loop_footer
    %s13 = sadd.s32 1, %s9
  $region7: #{operator2_forward.1} parent=0 // loop_footer_branch
    %8 = sbr.rel target = $region3
  $region8: #{operator2_forward.1} parent=0 // loop_exit
    _

</llo_original>
